<compile_context>
chip_gen: v5e
topology: v5e:2x2
jax: 0.10.0
libtpu: 0.0.40
codegen_flags: <defaults>
</compile_context>

<pallas_src>
import jax
import jax.numpy as jnp
from jax import lax
from jax.experimental import pallas as pl
from jax.experimental.pallas import tpu as pltpu

KSIZE = 3
EPS = 1e-5

# Rows of the packed per-channel f32 parameter table, shape (_PROWS, Cout):
#   conv1 bias, conv2 bias, skip bias, BN1 scale/shift, BN2 scale/shift.
_B1, _B2, _BS, _S1, _T1, _S2, _T2 = range(7)
_PROWS = 8  # padded to a full sublane group


# --------------------------- in-kernel helpers ------------------------------

def _fill_padded(pad_ref, tile_bf16):
    """Write tile (Nt, L, C) into pad_ref (Nt, L+2, C) with a zero halo row on
    each side.  Halo rows are re-zeroed every grid step (tiny store) so the
    kernel is correct under megacore 'parallel' splitting of the grid axis."""
    Nt, Lp, C = pad_ref.shape
    L = Lp - 2
    zrow = jnp.zeros((Nt, 1, C), jnp.bfloat16)
    pad_ref[:, 0:1, :] = zrow
    pad_ref[:, L + 1:L + 2, :] = zrow
    pad_ref[:, 1:L + 1, :] = tile_bf16


def _conv3_tapdots(pad_ref, w_ref, bias_row):
    """3-tap 'same' Conv1d as three accumulating MXU dots on shifted slices.
    pad_ref: (Nt, L+2, C) bf16 zero-halo scratch, w_ref: (3, C, Cout) bf16,
    bias_row: (1, Cout) f32.  Returns (Nt*L, Cout) f32."""
    Nt, Lp, C = pad_ref.shape
    L = Lp - 2
    acc = jnp.dot(pad_ref[:, 0:L, :].reshape(Nt * L, C), w_ref[0],
                  preferred_element_type=jnp.float32)
    for k in range(1, KSIZE):  # 3 static taps, unrolled at trace time
        acc = acc + jnp.dot(pad_ref[:, k:k + L, :].reshape(Nt * L, C), w_ref[k],
                            preferred_element_type=jnp.float32)
    return acc + bias_row


def _conv1(x_ref, w1_ref, pp_ref, xpad_ref):
    _fill_padded(xpad_ref, x_ref[...])
    return _conv3_tapdots(xpad_ref, w1_ref, pp_ref[_B1:_B1 + 1, :])


def _bn_relu(acc, pp_ref, srow, trow):
    return jnp.maximum(acc * pp_ref[srow:srow + 1, :] + pp_ref[trow:trow + 1, :],
                       0.0)


def _partial_stats(acc, stats_ref):
    s = jnp.sum(acc, axis=0, keepdims=True)          # (1, Cout)
    q = jnp.sum(acc * acc, axis=0, keepdims=True)    # (1, Cout)
    stats_ref[...] = jnp.concatenate([s, q], axis=0).reshape(1, 2, -1)


# ------------------------------- kernels ------------------------------------

def _stats1_kernel(x_ref, w1_ref, pp_ref, stats_ref, xpad_ref):
    acc1 = _conv1(x_ref, w1_ref, pp_ref, xpad_ref)
    _partial_stats(acc1, stats_ref)


def _stats2_kernel(x_ref, w1_ref, w2_ref, pp_ref, stats_ref, xpad_ref, hpad_ref):
    Nt, L, _ = x_ref.shape
    Cout = stats_ref.shape[-1]
    acc1 = _conv1(x_ref, w1_ref, pp_ref, xpad_ref)
    h = _bn_relu(acc1, pp_ref, _S1, _T1)
    # cast to bf16 once, then shifted slices come from the bf16 halo scratch
    _fill_padded(hpad_ref, h.astype(jnp.bfloat16).reshape(Nt, L, Cout))
    acc2 = _conv3_tapdots(hpad_ref, w2_ref, pp_ref[_B2:_B2 + 1, :])
    _partial_stats(acc2, stats_ref)


def _final_kernel(x_ref, w1_ref, w2_ref, ws_ref, pp_ref, out_ref,
                  xpad_ref, hpad_ref):
    Nt, L, Cin = x_ref.shape
    Cout = out_ref.shape[-1]
    acc1 = _conv1(x_ref, w1_ref, pp_ref, xpad_ref)
    h = _bn_relu(acc1, pp_ref, _S1, _T1)
    _fill_padded(hpad_ref, h.astype(jnp.bfloat16).reshape(Nt, L, Cout))
    acc2 = _conv3_tapdots(hpad_ref, w2_ref, pp_ref[_B2:_B2 + 1, :])
    # 1x1 skip conv, recomputed here from bf16 x (cheaper than an HBM roundtrip)
    ident = jnp.dot(x_ref[...].reshape(Nt * L, Cin), ws_ref[...],
                    preferred_element_type=jnp.float32) + pp_ref[_BS:_BS + 1, :]
    y = acc2 * pp_ref[_S2:_S2 + 1, :] + pp_ref[_T2:_T2 + 1, :] + ident
    out_ref[...] = jnp.maximum(y, 0.0).reshape(Nt, L, Cout)


# ------------------------------- wrapper -------------------------------------

def init_params(key, in_channels, out_channels):
    ks = jax.random.split(key, 6)
    s1 = 1.0 / jnp.sqrt(in_channels * KSIZE * 1.0)
    s2 = 1.0 / jnp.sqrt(out_channels * KSIZE * 1.0)
    ss = 1.0 / jnp.sqrt(in_channels * 1.0)
    u = jax.random.uniform
    return {
        # conv weights tap-major: (K, Cin, Cout) / (Cin, Cout)
        "w1": u(ks[0], (KSIZE, in_channels, out_channels), jnp.float32, -s1, s1),
        "b1": u(ks[1], (out_channels,), jnp.float32, -s1, s1),
        "w2": u(ks[2], (KSIZE, out_channels, out_channels), jnp.float32, -s2, s2),
        "b2": u(ks[3], (out_channels,), jnp.float32, -s2, s2),
        "ws": u(ks[4], (in_channels, out_channels), jnp.float32, -ss, ss),
        "bs": u(ks[5], (out_channels,), jnp.float32, -ss, ss),
        # BatchNorm affine params at PyTorch defaults
        "g1": jnp.ones((out_channels,), jnp.float32),
        "bt1": jnp.zeros((out_channels,), jnp.float32),
        "g2": jnp.ones((out_channels,), jnp.float32),
        "bt2": jnp.zeros((out_channels,), jnp.float32),
    }


def _pack_pp(b1, b2, bs, scale1, shift1, scale2, shift2):
    """Pack all per-channel f32 parameters into one resident (8, Cout) table."""
    zero = jnp.zeros_like(b1)
    rows = [zero] * _PROWS
    rows[_B1], rows[_B2], rows[_BS] = b1, b2, bs
    rows[_S1], rows[_T1] = scale1, shift1
    rows[_S2], rows[_T2] = scale2, shift2
    return jnp.stack(rows, axis=0)


def _pick_n_tile(N, L, target_rows=1024):
    """Largest batch-tile (divisor of N) covering <= target_rows rows of N*L,
    while keeping >= 2 grid steps when N > 1 so the DMA pipeline overlaps."""
    best = 1
    for d in range(1, N + 1):
        if N % d == 0 and d * L <= target_rows and (N == 1 or d <= N // 2):
            best = d
    return best


def residual_block(x_ncl, params):
    """x_ncl: (N, C_in, L) float32, PyTorch NCL layout. Returns (N, C_out, L)."""
    N, Cin, L = x_ncl.shape
    Cout = params["w1"].shape[-1]
    inv_nl = 1.0 / float(N * L)

    # Single wrapper HBM pass over x: NCL -> NLC + bf16 (XLA fuses transpose+cast).
    # The conv zero-padding is added inside the kernels (VMEM halo scratch).
    # TODO(synk): when stacking ResidualBlocks keep activations in NLC/bf16
    #             between blocks so these boundary transposes disappear.
    x = jnp.transpose(x_ncl, (0, 2, 1)).astype(jnp.bfloat16)

    w1 = params["w1"].astype(jnp.bfloat16)   # (3, Cin, Cout)
    w2 = params["w2"].astype(jnp.bfloat16)   # (3, Cout, Cout)
    ws = params["ws"].astype(jnp.bfloat16)   # (Cin, Cout)
    zero = jnp.zeros((Cout,), jnp.float32)

    nt = _pick_n_tile(N, L)
    num_tiles = N // nt
    grid = (num_tiles,)

    cparams = pltpu.CompilerParams(
        dimension_semantics=("parallel",),        # megacore split on v7x
        vmem_limit_bytes=48 * 1024 * 1024)        # fits v7x's 64 MiB physical VMEM

    # Streaming specs (double-buffered by the Pallas pipeline).
    x_spec = pl.BlockSpec((nt, L, Cin), lambda i: (i, 0, 0))
    out_spec = pl.BlockSpec((nt, L, Cout), lambda i: (i, 0, 0))
    stats_spec = pl.BlockSpec((1, 2, Cout), lambda i: (i, 0, 0))
    # Resident specs: constant index_map -> DMA'd once, kept in VMEM across steps.
    w1_spec = pl.BlockSpec((KSIZE, Cin, Cout), lambda i: (0, 0, 0))
    w2_spec = pl.BlockSpec((KSIZE, Cout, Cout), lambda i: (0, 0, 0))
    ws_spec = pl.BlockSpec((Cin, Cout), lambda i: (0, 0))
    pp_spec = pl.BlockSpec((_PROWS, Cout), lambda i: (0, 0))

    xpad_scratch = pltpu.VMEM((nt, L + 2, Cin), jnp.bfloat16)
    hpad_scratch = pltpu.VMEM((nt, L + 2, Cout), jnp.bfloat16)
    stats_shape = jax.ShapeDtypeStruct((num_tiles, 2, Cout), jnp.float32)

    def fold_bn(stats, gamma, beta):
        s = jnp.sum(stats[:, 0, :], axis=0)
        q = jnp.sum(stats[:, 1, :], axis=0)
        mean = s * inv_nl
        var = jnp.maximum(q * inv_nl - mean * mean, 0.0)   # clamp: cancellation-safe
        scale = gamma * lax.rsqrt(var + EPS)
        shift = beta - mean * scale
        return scale, shift
        # TODO(synk): switch to shifted-sum / Welford accumulation for very large N*L.

    # ---- pass 1: conv1 -> partial BN1 stats per tile ------------------------
    pp0 = _pack_pp(params["b1"], params["b2"], params["bs"], zero, zero, zero, zero)
    stats1 = pl.pallas_call(
        _stats1_kernel, grid=grid,
        in_specs=[x_spec, w1_spec, pp_spec], out_specs=stats_spec,
        out_shape=stats_shape, scratch_shapes=[xpad_scratch],
        compiler_params=cparams,
    )(x, w1, pp0)
    scale1, shift1 = fold_bn(stats1, params["g1"], params["bt1"])

    # ---- pass 2: conv1 -> BN1+ReLU -> conv2 -> partial BN2 stats ------------
    pp1 = _pack_pp(params["b1"], params["b2"], params["bs"], scale1, shift1, zero, zero)
    stats2 = pl.pallas_call(
        _stats2_kernel, grid=grid,
        in_specs=[x_spec, w1_spec, w2_spec, pp_spec], out_specs=stats_spec,
        out_shape=stats_shape, scratch_shapes=[xpad_scratch, hpad_scratch],
        compiler_params=cparams,
    )(x, w1, w2, pp1)
    scale2, shift2 = fold_bn(stats2, params["g2"], params["bt2"])

    # ---- pass 3: full block with both BNs folded to per-channel mul-add -----
    pp2 = _pack_pp(params["b1"], params["b2"], params["bs"],
                   scale1, shift1, scale2, shift2)
    out_nlc = pl.pallas_call(
        _final_kernel, grid=grid,
        in_specs=[x_spec, w1_spec, w2_spec, ws_spec, pp_spec], out_specs=out_spec,
        out_shape=jax.ShapeDtypeStruct((N, L, Cout), jnp.float32),
        scratch_shapes=[xpad_scratch, hpad_scratch],
        compiler_params=cparams,
    )(x, w1, w2, ws, pp2)

    return jnp.transpose(out_nlc, (0, 2, 1))   # back to PyTorch NCL


if __name__ == "__main__":
    key = jax.random.PRNGKey(0)
    k_x, k_p = jax.random.split(key)

    N, C_IN, C_OUT, L = 2, 4, 8, 16
    x = jax.random.normal(k_x, (N, C_IN, L), dtype=jnp.float32)
    params = init_params(k_p, C_IN, C_OUT)

    out = jax.jit(residual_block)(x, params)
    jax.block_until_ready(out)
    assert out.shape == (N, C_OUT, L)
    assert bool(jnp.all(jnp.isfinite(out)))
    print("KERNEL_OK")
</pallas_src>

<mosaic_0001>
module attributes {stable_mosaic.version = 11 : i64} {
  func.func @_stats1_kernel(%arg0: i32, %arg1: memref<1x16x4xbf16, #tpu.memory_space<vmem>>, %arg2: memref<3x4x8xbf16, #tpu.memory_space<vmem>>, %arg3: memref<8x8xf32, #tpu.memory_space<vmem>>, %arg4: memref<1x2x8xf32, #tpu.memory_space<vmem>>, %arg5: memref<1x18x4xbf16, #tpu.memory_space<vmem>>) attributes {dimension_semantics = [#tpu.dimension_semantics<parallel>], iteration_bounds = array<i64: 2>, scalar_prefetch = 0 : i64, scratch_operands = 1 : i64, tpu.core_type = #tpu.core_type<tc>, window_params = [{transform_indices = @transform_0, window_bounds = array<i64: 1, 16, 4>}, {pipeline_mode = #tpu.pipeline_mode<synchronous>, transform_indices = @transform_1, window_bounds = array<i64: 3, 4, 8>}, {pipeline_mode = #tpu.pipeline_mode<synchronous>, transform_indices = @transform_2, window_bounds = array<i64: 8, 8>}, {transform_indices = @transform_3, window_bounds = array<i64: 1, 2, 8>}]} {
    %c0 = arith.constant 0 : index
    %c0_0 = arith.constant 0 : index
    %c0_1 = arith.constant 0 : index
    %0 = vector.load %arg1[%c0, %c0_0, %c0_1] : memref<1x16x4xbf16, #tpu.memory_space<vmem>>, vector<1x16x4xbf16>
    %cst = arith.constant 0.000000e+00 : bf16
    %1 = vector.broadcast %cst : bf16 to vector<1x1x4xbf16>
    %c0_2 = arith.constant 0 : index
    %c0_3 = arith.constant 0 : index
    %c0_4 = arith.constant 0 : index
    %2 = vector.load %arg5[%c0_2, %c0_3, %c0_4] : memref<1x18x4xbf16, #tpu.memory_space<vmem>>, vector<1x1x4xbf16>
    tpu.vector_store %arg5[%c0_2, %c0_3, %c0_4], %1 {strides = array<i32>} : memref<1x18x4xbf16, #tpu.memory_space<vmem>>, vector<1x1x4xbf16>,
    %c0_5 = arith.constant 0 : index
    %c17 = arith.constant 17 : index
    %c0_6 = arith.constant 0 : index
    %3 = vector.load %arg5[%c0_5, %c17, %c0_6] : memref<1x18x4xbf16, #tpu.memory_space<vmem>>, vector<1x1x4xbf16>
    tpu.vector_store %arg5[%c0_5, %c17, %c0_6], %1 {strides = array<i32>} : memref<1x18x4xbf16, #tpu.memory_space<vmem>>, vector<1x1x4xbf16>,
    %c0_7 = arith.constant 0 : index
    %c1 = arith.constant 1 : index
    %c0_8 = arith.constant 0 : index
    %4 = vector.load %arg5[%c0_7, %c1, %c0_8] : memref<1x18x4xbf16, #tpu.memory_space<vmem>>, vector<1x16x4xbf16>
    tpu.vector_store %arg5[%c0_7, %c1, %c0_8], %0 {strides = array<i32>} : memref<1x18x4xbf16, #tpu.memory_space<vmem>>, vector<1x16x4xbf16>,
    %c0_9 = arith.constant 0 : index
    %c0_10 = arith.constant 0 : index
    %5 = vector.load %arg3[%c0_9, %c0_10] : memref<8x8xf32, #tpu.memory_space<vmem>>, vector<1x8xf32>
    %c0_11 = arith.constant 0 : index
    %c0_12 = arith.constant 0 : index
    %c0_13 = arith.constant 0 : index
    %6 = vector.load %arg5[%c0_11, %c0_12, %c0_13] : memref<1x18x4xbf16, #tpu.memory_space<vmem>>, vector<1x16x4xbf16>
    %7 = vector.shape_cast %6 : vector<1x16x4xbf16> to vector<16x4xbf16>
    %c0_14 = arith.constant 0 : index
    %c0_15 = arith.constant 0 : index
    %c0_16 = arith.constant 0 : index
    %8 = vector.load %arg2[%c0_14, %c0_15, %c0_16] : memref<3x4x8xbf16, #tpu.memory_space<vmem>>, vector<1x4x8xbf16>
    %9 = vector.shape_cast %8 : vector<1x4x8xbf16> to vector<4x8xbf16>
    %cst_17 = arith.constant dense<0.000000e+00> : vector<16x8xf32>
    %10 = tpu.matmul %7, %9, %cst_17 {dimension_numbers = #tpu.dot_dimension_numbers<[1], [0], [0], [1], [0, 0, 1, 1], [], []>} : vector<16x4xbf16>, vector<4x8xbf16>, vector<16x8xf32> -> vector<16x8xf32>
    %c0_18 = arith.constant 0 : index
    %c1_19 = arith.constant 1 : index
    %c0_20 = arith.constant 0 : index
    %11 = vector.load %arg5[%c0_18, %c1_19, %c0_20] : memref<1x18x4xbf16, #tpu.memory_space<vmem>>, vector<1x16x4xbf16>
    %12 = vector.shape_cast %11 : vector<1x16x4xbf16> to vector<16x4xbf16>
    %c1_21 = arith.constant 1 : index
    %c0_22 = arith.constant 0 : index
    %c0_23 = arith.constant 0 : index
    %13 = vector.load %arg2[%c1_21, %c0_22, %c0_23] : memref<3x4x8xbf16, #tpu.memory_space<vmem>>, vector<1x4x8xbf16>
    %14 = vector.shape_cast %13 : vector<1x4x8xbf16> to vector<4x8xbf16>
    %cst_24 = arith.constant dense<0.000000e+00> : vector<16x8xf32>
    %15 = tpu.matmul %12, %14, %cst_24 {dimension_numbers = #tpu.dot_dimension_numbers<[1], [0], [0], [1], [0, 0, 1, 1], [], []>} : vector<16x4xbf16>, vector<4x8xbf16>, vector<16x8xf32> -> vector<16x8xf32>
    %16 = arith.addf %10, %15 : vector<16x8xf32>
    %c0_25 = arith.constant 0 : index
    %c2 = arith.constant 2 : index
    %c0_26 = arith.constant 0 : index
    %17 = vector.load %arg5[%c0_25, %c2, %c0_26] : memref<1x18x4xbf16, #tpu.memory_space<vmem>>, vector<1x16x4xbf16>
    %18 = vector.shape_cast %17 : vector<1x16x4xbf16> to vector<16x4xbf16>
    %c2_27 = arith.constant 2 : index
    %c0_28 = arith.constant 0 : index
    %c0_29 = arith.constant 0 : index
    %19 = vector.load %arg2[%c2_27, %c0_28, %c0_29] : memref<3x4x8xbf16, #tpu.memory_space<vmem>>, vector<1x4x8xbf16>
    %20 = vector.shape_cast %19 : vector<1x4x8xbf16> to vector<4x8xbf16>
    %cst_30 = arith.constant dense<0.000000e+00> : vector<16x8xf32>
    %21 = tpu.matmul %18, %20, %cst_30 {dimension_numbers = #tpu.dot_dimension_numbers<[1], [0], [0], [1], [0, 0, 1, 1], [], []>} : vector<16x4xbf16>, vector<4x8xbf16>, vector<16x8xf32> -> vector<16x8xf32>
    %22 = arith.addf %16, %21 : vector<16x8xf32>
    %23 = vector.broadcast %5 : vector<1x8xf32> to vector<16x8xf32>
    %24 = arith.addf %22, %23 : vector<16x8xf32>
    %cst_31 = arith.constant dense<0.000000e+00> : vector<8xf32>
    %25 = vector.multi_reduction <add>, %24, %cst_31 [0] : vector<16x8xf32> to vector<8xf32>
    %26 = vector.shape_cast %25 : vector<8xf32> to vector<1x8xf32>
    %27 = arith.mulf %24, %24 : vector<16x8xf32>
    %cst_32 = arith.constant dense<0.000000e+00> : vector<8xf32>
    %28 = vector.multi_reduction <add>, %27, %cst_32 [0] : vector<16x8xf32> to vector<8xf32>
    %29 = vector.shape_cast %28 : vector<8xf32> to vector<1x8xf32>
    %30 = tpu.concatenate %26, %29 in 0 : vector<1x8xf32>, vector<1x8xf32> -> vector<2x8xf32>
    %31 = vector.shape_cast %30 : vector<2x8xf32> to vector<1x2x8xf32>
    %c0_33 = arith.constant 0 : index
    %c0_34 = arith.constant 0 : index
    %c0_35 = arith.constant 0 : index
    %32 = vector.load %arg4[%c0_33, %c0_34, %c0_35] : memref<1x2x8xf32, #tpu.memory_space<vmem>>, vector<1x2x8xf32>
    tpu.vector_store %arg4[%c0_33, %c0_34, %c0_35], %31 {strides = array<i32>} : memref<1x2x8xf32, #tpu.memory_space<vmem>>, vector<1x2x8xf32>,
    return
  }
  func.func @transform_0(%arg0: i32) -> (i32, i32, i32) {
    %c0_i32 = arith.constant 0 : i32
    %c0_i32_0 = arith.constant 0 : i32
    %c0_i32_1 = arith.constant 0 : i32
    return %arg0, %c0_i32, %c0_i32_0 : i32, i32, i32
  }
  func.func @transform_1(%arg0: i32) -> (i32, i32, i32) {
    %c0_i32 = arith.constant 0 : i32
    %c0_i32_0 = arith.constant 0 : i32
    %c0_i32_1 = arith.constant 0 : i32
    %c0_i32_2 = arith.constant 0 : i32
    return %c0_i32, %c0_i32_0, %c0_i32_1 : i32, i32, i32
  }
  func.func @transform_2(%arg0: i32) -> (i32, i32) {
    %c0_i32 = arith.constant 0 : i32
    %c0_i32_0 = arith.constant 0 : i32
    %c0_i32_1 = arith.constant 0 : i32
    return %c0_i32, %c0_i32_0 : i32, i32
  }
  func.func @transform_3(%arg0: i32) -> (i32, i32, i32) {
    %c0_i32 = arith.constant 0 : i32
    %c0_i32_0 = arith.constant 0 : i32
    %c0_i32_1 = arith.constant 0 : i32
    return %arg0, %c0_i32, %c0_i32_0 : i32, i32, i32
  }
}

module attributes {stable_mosaic.version = 11 : i64} {
  func.func @_stats2_kernel(%arg0: i32, %arg1: memref<1x16x4xbf16, #tpu.memory_space<vmem>>, %arg2: memref<3x4x8xbf16, #tpu.memory_space<vmem>>, %arg3: memref<3x8x8xbf16, #tpu.memory_space<vmem>>, %arg4: memref<8x8xf32, #tpu.memory_space<vmem>>, %arg5: memref<1x2x8xf32, #tpu.memory_space<vmem>>, %arg6: memref<1x18x4xbf16, #tpu.memory_space<vmem>>, %arg7: memref<1x18x8xbf16, #tpu.memory_space<vmem>>) attributes {dimension_semantics = [#tpu.dimension_semantics<parallel>], iteration_bounds = array<i64: 2>, scalar_prefetch = 0 : i64, scratch_operands = 2 : i64, tpu.core_type = #tpu.core_type<tc>, window_params = [{transform_indices = @transform_0, window_bounds = array<i64: 1, 16, 4>}, {pipeline_mode = #tpu.pipeline_mode<synchronous>, transform_indices = @transform_1, window_bounds = array<i64: 3, 4, 8>}, {pipeline_mode = #tpu.pipeline_mode<synchronous>, transform_indices = @transform_2, window_bounds = array<i64: 3, 8, 8>}, {pipeline_mode = #tpu.pipeline_mode<synchronous>, transform_indices = @transform_3, window_bounds = array<i64: 8, 8>}, {transform_indices = @transform_4, window_bounds = array<i64: 1, 2, 8>}]} {
    %c0 = arith.constant 0 : index
    %c0_0 = arith.constant 0 : index
    %c0_1 = arith.constant 0 : index
    %0 = vector.load %arg1[%c0, %c0_0, %c0_1] : memref<1x16x4xbf16, #tpu.memory_space<vmem>>, vector<1x16x4xbf16>
    %cst = arith.constant 0.000000e+00 : bf16
    %1 = vector.broadcast %cst : bf16 to vector<1x1x4xbf16>
    %c0_2 = arith.constant 0 : index
    %c0_3 = arith.constant 0 : index
    %c0_4 = arith.constant 0 : index
    %2 = vector.load %arg6[%c0_2, %c0_3, %c0_4] : memref<1x18x4xbf16, #tpu.memory_space<vmem>>, vector<1x1x4xbf16>
    tpu.vector_store %arg6[%c0_2, %c0_3, %c0_4], %1 {strides = array<i32>} : memref<1x18x4xbf16, #tpu.memory_space<vmem>>, vector<1x1x4xbf16>,
    %c0_5 = arith.constant 0 : index
    %c17 = arith.constant 17 : index
    %c0_6 = arith.constant 0 : index
    %3 = vector.load %arg6[%c0_5, %c17, %c0_6] : memref<1x18x4xbf16, #tpu.memory_space<vmem>>, vector<1x1x4xbf16>
    tpu.vector_store %arg6[%c0_5, %c17, %c0_6], %1 {strides = array<i32>} : memref<1x18x4xbf16, #tpu.memory_space<vmem>>, vector<1x1x4xbf16>,
    %c0_7 = arith.constant 0 : index
    %c1 = arith.constant 1 : index
    %c0_8 = arith.constant 0 : index
    %4 = vector.load %arg6[%c0_7, %c1, %c0_8] : memref<1x18x4xbf16, #tpu.memory_space<vmem>>, vector<1x16x4xbf16>
    tpu.vector_store %arg6[%c0_7, %c1, %c0_8], %0 {strides = array<i32>} : memref<1x18x4xbf16, #tpu.memory_space<vmem>>, vector<1x16x4xbf16>,
    %c0_9 = arith.constant 0 : index
    %c0_10 = arith.constant 0 : index
    %5 = vector.load %arg4[%c0_9, %c0_10] : memref<8x8xf32, #tpu.memory_space<vmem>>, vector<1x8xf32>
    %c0_11 = arith.constant 0 : index
    %c0_12 = arith.constant 0 : index
    %c0_13 = arith.constant 0 : index
    %6 = vector.load %arg6[%c0_11, %c0_12, %c0_13] : memref<1x18x4xbf16, #tpu.memory_space<vmem>>, vector<1x16x4xbf16>
    %7 = vector.shape_cast %6 : vector<1x16x4xbf16> to vector<16x4xbf16>
    %c0_14 = arith.constant 0 : index
    %c0_15 = arith.constant 0 : index
    %c0_16 = arith.constant 0 : index
    %8 = vector.load %arg2[%c0_14, %c0_15, %c0_16] : memref<3x4x8xbf16, #tpu.memory_space<vmem>>, vector<1x4x8xbf16>
    %9 = vector.shape_cast %8 : vector<1x4x8xbf16> to vector<4x8xbf16>
    %cst_17 = arith.constant dense<0.000000e+00> : vector<16x8xf32>
    %10 = tpu.matmul %7, %9, %cst_17 {dimension_numbers = #tpu.dot_dimension_numbers<[1], [0], [0], [1], [0, 0, 1, 1], [], []>} : vector<16x4xbf16>, vector<4x8xbf16>, vector<16x8xf32> -> vector<16x8xf32>
    %c0_18 = arith.constant 0 : index
    %c1_19 = arith.constant 1 : index
    %c0_20 = arith.constant 0 : index
    %11 = vector.load %arg6[%c0_18, %c1_19, %c0_20] : memref<1x18x4xbf16, #tpu.memory_space<vmem>>, vector<1x16x4xbf16>
    %12 = vector.shape_cast %11 : vector<1x16x4xbf16> to vector<16x4xbf16>
    %c1_21 = arith.constant 1 : index
    %c0_22 = arith.constant 0 : index
    %c0_23 = arith.constant 0 : index
    %13 = vector.load %arg2[%c1_21, %c0_22, %c0_23] : memref<3x4x8xbf16, #tpu.memory_space<vmem>>, vector<1x4x8xbf16>
    %14 = vector.shape_cast %13 : vector<1x4x8xbf16> to vector<4x8xbf16>
    %cst_24 = arith.constant dense<0.000000e+00> : vector<16x8xf32>
    %15 = tpu.matmul %12, %14, %cst_24 {dimension_numbers = #tpu.dot_dimension_numbers<[1], [0], [0], [1], [0, 0, 1, 1], [], []>} : vector<16x4xbf16>, vector<4x8xbf16>, vector<16x8xf32> -> vector<16x8xf32>
    %16 = arith.addf %10, %15 : vector<16x8xf32>
    %c0_25 = arith.constant 0 : index
    %c2 = arith.constant 2 : index
    %c0_26 = arith.constant 0 : index
    %17 = vector.load %arg6[%c0_25, %c2, %c0_26] : memref<1x18x4xbf16, #tpu.memory_space<vmem>>, vector<1x16x4xbf16>
    %18 = vector.shape_cast %17 : vector<1x16x4xbf16> to vector<16x4xbf16>
    %c2_27 = arith.constant 2 : index
    %c0_28 = arith.constant 0 : index
    %c0_29 = arith.constant 0 : index
    %19 = vector.load %arg2[%c2_27, %c0_28, %c0_29] : memref<3x4x8xbf16, #tpu.memory_space<vmem>>, vector<1x4x8xbf16>
    %20 = vector.shape_cast %19 : vector<1x4x8xbf16> to vector<4x8xbf16>
    %cst_30 = arith.constant dense<0.000000e+00> : vector<16x8xf32>
    %21 = tpu.matmul %18, %20, %cst_30 {dimension_numbers = #tpu.dot_dimension_numbers<[1], [0], [0], [1], [0, 0, 1, 1], [], []>} : vector<16x4xbf16>, vector<4x8xbf16>, vector<16x8xf32> -> vector<16x8xf32>
    %22 = arith.addf %16, %21 : vector<16x8xf32>
    %23 = vector.broadcast %5 : vector<1x8xf32> to vector<16x8xf32>
    %24 = arith.addf %22, %23 : vector<16x8xf32>
    %c3 = arith.constant 3 : index
    %c0_31 = arith.constant 0 : index
    %25 = vector.load %arg4[%c3, %c0_31] : memref<8x8xf32, #tpu.memory_space<vmem>>, vector<1x8xf32>
    %26 = vector.broadcast %25 : vector<1x8xf32> to vector<16x8xf32>
    %27 = arith.mulf %24, %26 : vector<16x8xf32>
    %c4 = arith.constant 4 : index
    %c0_32 = arith.constant 0 : index
    %28 = vector.load %arg4[%c4, %c0_32] : memref<8x8xf32, #tpu.memory_space<vmem>>, vector<1x8xf32>
    %29 = vector.broadcast %28 : vector<1x8xf32> to vector<16x8xf32>
    %30 = arith.addf %27, %29 : vector<16x8xf32>
    %cst_33 = arith.constant 0.000000e+00 : f32
    %31 = vector.broadcast %cst_33 : f32 to vector<16x8xf32>
    %32 = arith.maximumf %30, %31 : vector<16x8xf32>
    %33 = arith.truncf %32 : vector<16x8xf32> to vector<16x8xbf16>
    %34 = vector.shape_cast %33 : vector<16x8xbf16> to vector<1x16x8xbf16>
    %cst_34 = arith.constant 0.000000e+00 : bf16
    %35 = vector.broadcast %cst_34 : bf16 to vector<1x1x8xbf16>
    %c0_35 = arith.constant 0 : index
    %c0_36 = arith.constant 0 : index
    %c0_37 = arith.constant 0 : index
    %36 = vector.load %arg7[%c0_35, %c0_36, %c0_37] : memref<1x18x8xbf16, #tpu.memory_space<vmem>>, vector<1x1x8xbf16>
    tpu.vector_store %arg7[%c0_35, %c0_36, %c0_37], %35 {strides = array<i32>} : memref<1x18x8xbf16, #tpu.memory_space<vmem>>, vector<1x1x8xbf16>,
    %c0_38 = arith.constant 0 : index
    %c17_39 = arith.constant 17 : index
    %c0_40 = arith.constant 0 : index
    %37 = vector.load %arg7[%c0_38, %c17_39, %c0_40] : memref<1x18x8xbf16, #tpu.memory_space<vmem>>, vector<1x1x8xbf16>
    tpu.vector_store %arg7[%c0_38, %c17_39, %c0_40], %35 {strides = array<i32>} : memref<1x18x8xbf16, #tpu.memory_space<vmem>>, vector<1x1x8xbf16>,
    %c0_41 = arith.constant 0 : index
    %c1_42 = arith.constant 1 : index
    %c0_43 = arith.constant 0 : index
    %38 = vector.load %arg7[%c0_41, %c1_42, %c0_43] : memref<1x18x8xbf16, #tpu.memory_space<vmem>>, vector<1x16x8xbf16>
    tpu.vector_store %arg7[%c0_41, %c1_42, %c0_43], %34 {strides = array<i32>} : memref<1x18x8xbf16, #tpu.memory_space<vmem>>, vector<1x16x8xbf16>,
    %c1_44 = arith.constant 1 : index
    %c0_45 = arith.constant 0 : index
    %39 = vector.load %arg4[%c1_44, %c0_45] : memref<8x8xf32, #tpu.memory_space<vmem>>, vector<1x8xf32>
    %c0_46 = arith.constant 0 : index
    %c0_47 = arith.constant 0 : index
    %c0_48 = arith.constant 0 : index
    %40 = vector.load %arg7[%c0_46, %c0_47, %c0_48] : memref<1x18x8xbf16, #tpu.memory_space<vmem>>, vector<1x16x8xbf16>
    %41 = vector.shape_cast %40 : vector<1x16x8xbf16> to vector<16x8xbf16>
    %c0_49 = arith.constant 0 : index
    %c0_50 = arith.constant 0 : index
    %c0_51 = arith.constant 0 : index
    %42 = vector.load %arg3[%c0_49, %c0_50, %c0_51] : memref<3x8x8xbf16, #tpu.memory_space<vmem>>, vector<1x8x8xbf16>
    %43 = vector.shape_cast %42 : vector<1x8x8xbf16> to vector<8x8xbf16>
    %cst_52 = arith.constant dense<0.000000e+00> : vector<16x8xf32>
    %44 = tpu.matmul %41, %43, %cst_52 {dimension_numbers = #tpu.dot_dimension_numbers<[1], [0], [0], [1], [0, 0, 1, 1], [], []>} : vector<16x8xbf16>, vector<8x8xbf16>, vector<16x8xf32> -> vector<16x8xf32>
    %c0_53 = arith.constant 0 : index
    %c1_54 = arith.constant 1 : index
    %c0_55 = arith.constant 0 : index
    %45 = vector.load %arg7[%c0_53, %c1_54, %c0_55] : memref<1x18x8xbf16, #tpu.memory_space<vmem>>, vector<1x16x8xbf16>
    %46 = vector.shape_cast %45 : vector<1x16x8xbf16> to vector<16x8xbf16>
    %c1_56 = arith.constant 1 : index
    %c0_57 = arith.constant 0 : index
    %c0_58 = arith.constant 0 : index
    %47 = vector.load %arg3[%c1_56, %c0_57, %c0_58] : memref<3x8x8xbf16, #tpu.memory_space<vmem>>, vector<1x8x8xbf16>
    %48 = vector.shape_cast %47 : vector<1x8x8xbf16> to vector<8x8xbf16>
    %cst_59 = arith.constant dense<0.000000e+00> : vector<16x8xf32>
    %49 = tpu.matmul %46, %48, %cst_59 {dimension_numbers = #tpu.dot_dimension_numbers<[1], [0], [0], [1], [0, 0, 1, 1], [], []>} : vector<16x8xbf16>, vector<8x8xbf16>, vector<16x8xf32> -> vector<16x8xf32>
    %50 = arith.addf %44, %49 : vector<16x8xf32>
    %c0_60 = arith.constant 0 : index
    %c2_61 = arith.constant 2 : index
    %c0_62 = arith.constant 0 : index
    %51 = vector.load %arg7[%c0_60, %c2_61, %c0_62] : memref<1x18x8xbf16, #tpu.memory_space<vmem>>, vector<1x16x8xbf16>
    %52 = vector.shape_cast %51 : vector<1x16x8xbf16> to vector<16x8xbf16>
    %c2_63 = arith.constant 2 : index
    %c0_64 = arith.constant 0 : index
    %c0_65 = arith.constant 0 : index
    %53 = vector.load %arg3[%c2_63, %c0_64, %c0_65] : memref<3x8x8xbf16, #tpu.memory_space<vmem>>, vector<1x8x8xbf16>
    %54 = vector.shape_cast %53 : vector<1x8x8xbf16> to vector<8x8xbf16>
    %cst_66 = arith.constant dense<0.000000e+00> : vector<16x8xf32>
    %55 = tpu.matmul %52, %54, %cst_66 {dimension_numbers = #tpu.dot_dimension_numbers<[1], [0], [0], [1], [0, 0, 1, 1], [], []>} : vector<16x8xbf16>, vector<8x8xbf16>, vector<16x8xf32> -> vector<16x8xf32>
    %56 = arith.addf %50, %55 : vector<16x8xf32>
    %57 = vector.broadcast %39 : vector<1x8xf32> to vector<16x8xf32>
    %58 = arith.addf %56, %57 : vector<16x8xf32>
    %cst_67 = arith.constant dense<0.000000e+00> : vector<8xf32>
    %59 = vector.multi_reduction <add>, %58, %cst_67 [0] : vector<16x8xf32> to vector<8xf32>
    %60 = vector.shape_cast %59 : vector<8xf32> to vector<1x8xf32>
    %61 = arith.mulf %58, %58 : vector<16x8xf32>
    %cst_68 = arith.constant dense<0.000000e+00> : vector<8xf32>
    %62 = vector.multi_reduction <add>, %61, %cst_68 [0] : vector<16x8xf32> to vector<8xf32>
    %63 = vector.shape_cast %62 : vector<8xf32> to vector<1x8xf32>
    %64 = tpu.concatenate %60, %63 in 0 : vector<1x8xf32>, vector<1x8xf32> -> vector<2x8xf32>
    %65 = vector.shape_cast %64 : vector<2x8xf32> to vector<1x2x8xf32>
    %c0_69 = arith.constant 0 : index
    %c0_70 = arith.constant 0 : index
    %c0_71 = arith.constant 0 : index
    %66 = vector.load %arg5[%c0_69, %c0_70, %c0_71] : memref<1x2x8xf32, #tpu.memory_space<vmem>>, vector<1x2x8xf32>
    tpu.vector_store %arg5[%c0_69, %c0_70, %c0_71], %65 {strides = array<i32>} : memref<1x2x8xf32, #tpu.memory_space<vmem>>, vector<1x2x8xf32>,
    return
  }
  func.func @transform_0(%arg0: i32) -> (i32, i32, i32) {
    %c0_i32 = arith.constant 0 : i32
    %c0_i32_0 = arith.constant 0 : i32
    %c0_i32_1 = arith.constant 0 : i32
    return %arg0, %c0_i32, %c0_i32_0 : i32, i32, i32
  }
  func.func @transform_1(%arg0: i32) -> (i32, i32, i32) {
    %c0_i32 = arith.constant 0 : i32
    %c0_i32_0 = arith.constant 0 : i32
    %c0_i32_1 = arith.constant 0 : i32
    %c0_i32_2 = arith.constant 0 : i32
    return %c0_i32, %c0_i32_0, %c0_i32_1 : i32, i32, i32
  }
  func.func @transform_2(%arg0: i32) -> (i32, i32, i32) {
    %c0_i32 = arith.constant 0 : i32
    %c0_i32_0 = arith.constant 0 : i32
    %c0_i32_1 = arith.constant 0 : i32
    %c0_i32_2 = arith.constant 0 : i32
    return %c0_i32, %c0_i32_0, %c0_i32_1 : i32, i32, i32
  }
  func.func @transform_3(%arg0: i32) -> (i32, i32) {
    %c0_i32 = arith.constant 0 : i32
    %c0_i32_0 = arith.constant 0 : i32
    %c0_i32_1 = arith.constant 0 : i32
    return %c0_i32, %c0_i32_0 : i32, i32
  }
  func.func @transform_4(%arg0: i32) -> (i32, i32, i32) {
    %c0_i32 = arith.constant 0 : i32
    %c0_i32_0 = arith.constant 0 : i32
    %c0_i32_1 = arith.constant 0 : i32
    return %arg0, %c0_i32, %c0_i32_0 : i32, i32, i32
  }
}

module attributes {stable_mosaic.version = 11 : i64} {
  func.func @_final_kernel(%arg0: i32, %arg1: memref<1x16x4xbf16, #tpu.memory_space<vmem>>, %arg2: memref<3x4x8xbf16, #tpu.memory_space<vmem>>, %arg3: memref<3x8x8xbf16, #tpu.memory_space<vmem>>, %arg4: memref<4x8xbf16, #tpu.memory_space<vmem>>, %arg5: memref<8x8xf32, #tpu.memory_space<vmem>>, %arg6: memref<1x16x8xf32, #tpu.memory_space<vmem>>, %arg7: memref<1x18x4xbf16, #tpu.memory_space<vmem>>, %arg8: memref<1x18x8xbf16, #tpu.memory_space<vmem>>) attributes {dimension_semantics = [#tpu.dimension_semantics<parallel>], iteration_bounds = array<i64: 2>, scalar_prefetch = 0 : i64, scratch_operands = 2 : i64, tpu.core_type = #tpu.core_type<tc>, window_params = [{transform_indices = @transform_0, window_bounds = array<i64: 1, 16, 4>}, {pipeline_mode = #tpu.pipeline_mode<synchronous>, transform_indices = @transform_1, window_bounds = array<i64: 3, 4, 8>}, {pipeline_mode = #tpu.pipeline_mode<synchronous>, transform_indices = @transform_2, window_bounds = array<i64: 3, 8, 8>}, {pipeline_mode = #tpu.pipeline_mode<synchronous>, transform_indices = @transform_3, window_bounds = array<i64: 4, 8>}, {pipeline_mode = #tpu.pipeline_mode<synchronous>, transform_indices = @transform_4, window_bounds = array<i64: 8, 8>}, {transform_indices = @transform_5, window_bounds = array<i64: 1, 16, 8>}]} {
    %c0 = arith.constant 0 : index
    %c0_0 = arith.constant 0 : index
    %c0_1 = arith.constant 0 : index
    %0 = vector.load %arg1[%c0, %c0_0, %c0_1] : memref<1x16x4xbf16, #tpu.memory_space<vmem>>, vector<1x16x4xbf16>
    %cst = arith.constant 0.000000e+00 : bf16
    %1 = vector.broadcast %cst : bf16 to vector<1x1x4xbf16>
    %c0_2 = arith.constant 0 : index
    %c0_3 = arith.constant 0 : index
    %c0_4 = arith.constant 0 : index
    %2 = vector.load %arg7[%c0_2, %c0_3, %c0_4] : memref<1x18x4xbf16, #tpu.memory_space<vmem>>, vector<1x1x4xbf16>
    tpu.vector_store %arg7[%c0_2, %c0_3, %c0_4], %1 {strides = array<i32>} : memref<1x18x4xbf16, #tpu.memory_space<vmem>>, vector<1x1x4xbf16>,
    %c0_5 = arith.constant 0 : index
    %c17 = arith.constant 17 : index
    %c0_6 = arith.constant 0 : index
    %3 = vector.load %arg7[%c0_5, %c17, %c0_6] : memref<1x18x4xbf16, #tpu.memory_space<vmem>>, vector<1x1x4xbf16>
    tpu.vector_store %arg7[%c0_5, %c17, %c0_6], %1 {strides = array<i32>} : memref<1x18x4xbf16, #tpu.memory_space<vmem>>, vector<1x1x4xbf16>,
    %c0_7 = arith.constant 0 : index
    %c1 = arith.constant 1 : index
    %c0_8 = arith.constant 0 : index
    %4 = vector.load %arg7[%c0_7, %c1, %c0_8] : memref<1x18x4xbf16, #tpu.memory_space<vmem>>, vector<1x16x4xbf16>
    tpu.vector_store %arg7[%c0_7, %c1, %c0_8], %0 {strides = array<i32>} : memref<1x18x4xbf16, #tpu.memory_space<vmem>>, vector<1x16x4xbf16>,
    %c0_9 = arith.constant 0 : index
    %c0_10 = arith.constant 0 : index
    %5 = vector.load %arg5[%c0_9, %c0_10] : memref<8x8xf32, #tpu.memory_space<vmem>>, vector<1x8xf32>
    %c0_11 = arith.constant 0 : index
    %c0_12 = arith.constant 0 : index
    %c0_13 = arith.constant 0 : index
    %6 = vector.load %arg7[%c0_11, %c0_12, %c0_13] : memref<1x18x4xbf16, #tpu.memory_space<vmem>>, vector<1x16x4xbf16>
    %7 = vector.shape_cast %6 : vector<1x16x4xbf16> to vector<16x4xbf16>
    %c0_14 = arith.constant 0 : index
    %c0_15 = arith.constant 0 : index
    %c0_16 = arith.constant 0 : index
    %8 = vector.load %arg2[%c0_14, %c0_15, %c0_16] : memref<3x4x8xbf16, #tpu.memory_space<vmem>>, vector<1x4x8xbf16>
    %9 = vector.shape_cast %8 : vector<1x4x8xbf16> to vector<4x8xbf16>
    %cst_17 = arith.constant dense<0.000000e+00> : vector<16x8xf32>
    %10 = tpu.matmul %7, %9, %cst_17 {dimension_numbers = #tpu.dot_dimension_numbers<[1], [0], [0], [1], [0, 0, 1, 1], [], []>} : vector<16x4xbf16>, vector<4x8xbf16>, vector<16x8xf32> -> vector<16x8xf32>
    %c0_18 = arith.constant 0 : index
    %c1_19 = arith.constant 1 : index
    %c0_20 = arith.constant 0 : index
    %11 = vector.load %arg7[%c0_18, %c1_19, %c0_20] : memref<1x18x4xbf16, #tpu.memory_space<vmem>>, vector<1x16x4xbf16>
    %12 = vector.shape_cast %11 : vector<1x16x4xbf16> to vector<16x4xbf16>
    %c1_21 = arith.constant 1 : index
    %c0_22 = arith.constant 0 : index
    %c0_23 = arith.constant 0 : index
    %13 = vector.load %arg2[%c1_21, %c0_22, %c0_23] : memref<3x4x8xbf16, #tpu.memory_space<vmem>>, vector<1x4x8xbf16>
    %14 = vector.shape_cast %13 : vector<1x4x8xbf16> to vector<4x8xbf16>
    %cst_24 = arith.constant dense<0.000000e+00> : vector<16x8xf32>
    %15 = tpu.matmul %12, %14, %cst_24 {dimension_numbers = #tpu.dot_dimension_numbers<[1], [0], [0], [1], [0, 0, 1, 1], [], []>} : vector<16x4xbf16>, vector<4x8xbf16>, vector<16x8xf32> -> vector<16x8xf32>
    %16 = arith.addf %10, %15 : vector<16x8xf32>
    %c0_25 = arith.constant 0 : index
    %c2 = arith.constant 2 : index
    %c0_26 = arith.constant 0 : index
    %17 = vector.load %arg7[%c0_25, %c2, %c0_26] : memref<1x18x4xbf16, #tpu.memory_space<vmem>>, vector<1x16x4xbf16>
    %18 = vector.shape_cast %17 : vector<1x16x4xbf16> to vector<16x4xbf16>
    %c2_27 = arith.constant 2 : index
    %c0_28 = arith.constant 0 : index
    %c0_29 = arith.constant 0 : index
    %19 = vector.load %arg2[%c2_27, %c0_28, %c0_29] : memref<3x4x8xbf16, #tpu.memory_space<vmem>>, vector<1x4x8xbf16>
    %20 = vector.shape_cast %19 : vector<1x4x8xbf16> to vector<4x8xbf16>
    %cst_30 = arith.constant dense<0.000000e+00> : vector<16x8xf32>
    %21 = tpu.matmul %18, %20, %cst_30 {dimension_numbers = #tpu.dot_dimension_numbers<[1], [0], [0], [1], [0, 0, 1, 1], [], []>} : vector<16x4xbf16>, vector<4x8xbf16>, vector<16x8xf32> -> vector<16x8xf32>
    %22 = arith.addf %16, %21 : vector<16x8xf32>
    %23 = vector.broadcast %5 : vector<1x8xf32> to vector<16x8xf32>
    %24 = arith.addf %22, %23 : vector<16x8xf32>
    %c3 = arith.constant 3 : index
    %c0_31 = arith.constant 0 : index
    %25 = vector.load %arg5[%c3, %c0_31] : memref<8x8xf32, #tpu.memory_space<vmem>>, vector<1x8xf32>
    %26 = vector.broadcast %25 : vector<1x8xf32> to vector<16x8xf32>
    %27 = arith.mulf %24, %26 : vector<16x8xf32>
    %c4 = arith.constant 4 : index
    %c0_32 = arith.constant 0 : index
    %28 = vector.load %arg5[%c4, %c0_32] : memref<8x8xf32, #tpu.memory_space<vmem>>, vector<1x8xf32>
    %29 = vector.broadcast %28 : vector<1x8xf32> to vector<16x8xf32>
    %30 = arith.addf %27, %29 : vector<16x8xf32>
    %cst_33 = arith.constant 0.000000e+00 : f32
    %31 = vector.broadcast %cst_33 : f32 to vector<16x8xf32>
    %32 = arith.maximumf %30, %31 : vector<16x8xf32>
    %33 = arith.truncf %32 : vector<16x8xf32> to vector<16x8xbf16>
    %34 = vector.shape_cast %33 : vector<16x8xbf16> to vector<1x16x8xbf16>
    %cst_34 = arith.constant 0.000000e+00 : bf16
    %35 = vector.broadcast %cst_34 : bf16 to vector<1x1x8xbf16>
    %c0_35 = arith.constant 0 : index
    %c0_36 = arith.constant 0 : index
    %c0_37 = arith.constant 0 : index
    %36 = vector.load %arg8[%c0_35, %c0_36, %c0_37] : memref<1x18x8xbf16, #tpu.memory_space<vmem>>, vector<1x1x8xbf16>
    tpu.vector_store %arg8[%c0_35, %c0_36, %c0_37], %35 {strides = array<i32>} : memref<1x18x8xbf16, #tpu.memory_space<vmem>>, vector<1x1x8xbf16>,
    %c0_38 = arith.constant 0 : index
    %c17_39 = arith.constant 17 : index
    %c0_40 = arith.constant 0 : index
    %37 = vector.load %arg8[%c0_38, %c17_39, %c0_40] : memref<1x18x8xbf16, #tpu.memory_space<vmem>>, vector<1x1x8xbf16>
    tpu.vector_store %arg8[%c0_38, %c17_39, %c0_40], %35 {strides = array<i32>} : memref<1x18x8xbf16, #tpu.memory_space<vmem>>, vector<1x1x8xbf16>,
    %c0_41 = arith.constant 0 : index
    %c1_42 = arith.constant 1 : index
    %c0_43 = arith.constant 0 : index
    %38 = vector.load %arg8[%c0_41, %c1_42, %c0_43] : memref<1x18x8xbf16, #tpu.memory_space<vmem>>, vector<1x16x8xbf16>
    tpu.vector_store %arg8[%c0_41, %c1_42, %c0_43], %34 {strides = array<i32>} : memref<1x18x8xbf16, #tpu.memory_space<vmem>>, vector<1x16x8xbf16>,
    %c1_44 = arith.constant 1 : index
    %c0_45 = arith.constant 0 : index
    %39 = vector.load %arg5[%c1_44, %c0_45] : memref<8x8xf32, #tpu.memory_space<vmem>>, vector<1x8xf32>
    %c0_46 = arith.constant 0 : index
    %c0_47 = arith.constant 0 : index
    %c0_48 = arith.constant 0 : index
    %40 = vector.load %arg8[%c0_46, %c0_47, %c0_48] : memref<1x18x8xbf16, #tpu.memory_space<vmem>>, vector<1x16x8xbf16>
    %41 = vector.shape_cast %40 : vector<1x16x8xbf16> to vector<16x8xbf16>
    %c0_49 = arith.constant 0 : index
    %c0_50 = arith.constant 0 : index
    %c0_51 = arith.constant 0 : index
    %42 = vector.load %arg3[%c0_49, %c0_50, %c0_51] : memref<3x8x8xbf16, #tpu.memory_space<vmem>>, vector<1x8x8xbf16>
    %43 = vector.shape_cast %42 : vector<1x8x8xbf16> to vector<8x8xbf16>
    %cst_52 = arith.constant dense<0.000000e+00> : vector<16x8xf32>
    %44 = tpu.matmul %41, %43, %cst_52 {dimension_numbers = #tpu.dot_dimension_numbers<[1], [0], [0], [1], [0, 0, 1, 1], [], []>} : vector<16x8xbf16>, vector<8x8xbf16>, vector<16x8xf32> -> vector<16x8xf32>
    %c0_53 = arith.constant 0 : index
    %c1_54 = arith.constant 1 : index
    %c0_55 = arith.constant 0 : index
    %45 = vector.load %arg8[%c0_53, %c1_54, %c0_55] : memref<1x18x8xbf16, #tpu.memory_space<vmem>>, vector<1x16x8xbf16>
    %46 = vector.shape_cast %45 : vector<1x16x8xbf16> to vector<16x8xbf16>
    %c1_56 = arith.constant 1 : index
    %c0_57 = arith.constant 0 : index
    %c0_58 = arith.constant 0 : index
    %47 = vector.load %arg3[%c1_56, %c0_57, %c0_58] : memref<3x8x8xbf16, #tpu.memory_space<vmem>>, vector<1x8x8xbf16>
    %48 = vector.shape_cast %47 : vector<1x8x8xbf16> to vector<8x8xbf16>
    %cst_59 = arith.constant dense<0.000000e+00> : vector<16x8xf32>
    %49 = tpu.matmul %46, %48, %cst_59 {dimension_numbers = #tpu.dot_dimension_numbers<[1], [0], [0], [1], [0, 0, 1, 1], [], []>} : vector<16x8xbf16>, vector<8x8xbf16>, vector<16x8xf32> -> vector<16x8xf32>
    %50 = arith.addf %44, %49 : vector<16x8xf32>
    %c0_60 = arith.constant 0 : index
    %c2_61 = arith.constant 2 : index
    %c0_62 = arith.constant 0 : index
    %51 = vector.load %arg8[%c0_60, %c2_61, %c0_62] : memref<1x18x8xbf16, #tpu.memory_space<vmem>>, vector<1x16x8xbf16>
    %52 = vector.shape_cast %51 : vector<1x16x8xbf16> to vector<16x8xbf16>
    %c2_63 = arith.constant 2 : index
    %c0_64 = arith.constant 0 : index
    %c0_65 = arith.constant 0 : index
    %53 = vector.load %arg3[%c2_63, %c0_64, %c0_65] : memref<3x8x8xbf16, #tpu.memory_space<vmem>>, vector<1x8x8xbf16>
    %54 = vector.shape_cast %53 : vector<1x8x8xbf16> to vector<8x8xbf16>
    %cst_66 = arith.constant dense<0.000000e+00> : vector<16x8xf32>
    %55 = tpu.matmul %52, %54, %cst_66 {dimension_numbers = #tpu.dot_dimension_numbers<[1], [0], [0], [1], [0, 0, 1, 1], [], []>} : vector<16x8xbf16>, vector<8x8xbf16>, vector<16x8xf32> -> vector<16x8xf32>
    %56 = arith.addf %50, %55 : vector<16x8xf32>
    %57 = vector.broadcast %39 : vector<1x8xf32> to vector<16x8xf32>
    %58 = arith.addf %56, %57 : vector<16x8xf32>
    %c0_67 = arith.constant 0 : index
    %c0_68 = arith.constant 0 : index
    %c0_69 = arith.constant 0 : index
    %59 = vector.load %arg1[%c0_67, %c0_68, %c0_69] : memref<1x16x4xbf16, #tpu.memory_space<vmem>>, vector<1x16x4xbf16>
    %60 = vector.shape_cast %59 : vector<1x16x4xbf16> to vector<16x4xbf16>
    %c0_70 = arith.constant 0 : index
    %c0_71 = arith.constant 0 : index
    %61 = vector.load %arg4[%c0_70, %c0_71] : memref<4x8xbf16, #tpu.memory_space<vmem>>, vector<4x8xbf16>
    %cst_72 = arith.constant dense<0.000000e+00> : vector<16x8xf32>
    %62 = tpu.matmul %60, %61, %cst_72 {dimension_numbers = #tpu.dot_dimension_numbers<[1], [0], [0], [1], [0, 0, 1, 1], [], []>} : vector<16x4xbf16>, vector<4x8xbf16>, vector<16x8xf32> -> vector<16x8xf32>
    %c2_73 = arith.constant 2 : index
    %c0_74 = arith.constant 0 : index
    %63 = vector.load %arg5[%c2_73, %c0_74] : memref<8x8xf32, #tpu.memory_space<vmem>>, vector<1x8xf32>
    %64 = vector.broadcast %63 : vector<1x8xf32> to vector<16x8xf32>
    %65 = arith.addf %62, %64 : vector<16x8xf32>
    %c5 = arith.constant 5 : index
    %c0_75 = arith.constant 0 : index
    %66 = vector.load %arg5[%c5, %c0_75] : memref<8x8xf32, #tpu.memory_space<vmem>>, vector<1x8xf32>
    %67 = vector.broadcast %66 : vector<1x8xf32> to vector<16x8xf32>
    %68 = arith.mulf %58, %67 : vector<16x8xf32>
    %c6 = arith.constant 6 : index
    %c0_76 = arith.constant 0 : index
    %69 = vector.load %arg5[%c6, %c0_76] : memref<8x8xf32, #tpu.memory_space<vmem>>, vector<1x8xf32>
    %70 = vector.broadcast %69 : vector<1x8xf32> to vector<16x8xf32>
    %71 = arith.addf %68, %70 : vector<16x8xf32>
    %72 = arith.addf %71, %65 : vector<16x8xf32>
    %cst_77 = arith.constant 0.000000e+00 : f32
    %73 = vector.broadcast %cst_77 : f32 to vector<16x8xf32>
    %74 = arith.maximumf %72, %73 : vector<16x8xf32>
    %75 = vector.shape_cast %74 : vector<16x8xf32> to vector<1x16x8xf32>
    %c0_78 = arith.constant 0 : index
    %c0_79 = arith.constant 0 : index
    %c0_80 = arith.constant 0 : index
    %76 = vector.load %arg6[%c0_78, %c0_79, %c0_80] : memref<1x16x8xf32, #tpu.memory_space<vmem>>, vector<1x16x8xf32>
    tpu.vector_store %arg6[%c0_78, %c0_79, %c0_80], %75 {strides = array<i32>} : memref<1x16x8xf32, #tpu.memory_space<vmem>>, vector<1x16x8xf32>,
    return
  }
  func.func @transform_0(%arg0: i32) -> (i32, i32, i32) {
    %c0_i32 = arith.constant 0 : i32
    %c0_i32_0 = arith.constant 0 : i32
    %c0_i32_1 = arith.constant 0 : i32
    return %arg0, %c0_i32, %c0_i32_0 : i32, i32, i32
  }
  func.func @transform_1(%arg0: i32) -> (i32, i32, i32) {
    %c0_i32 = arith.constant 0 : i32
    %c0_i32_0 = arith.constant 0 : i32
    %c0_i32_1 = arith.constant 0 : i32
    %c0_i32_2 = arith.constant 0 : i32
    return %c0_i32, %c0_i32_0, %c0_i32_1 : i32, i32, i32
  }
  func.func @transform_2(%arg0: i32) -> (i32, i32, i32) {
    %c0_i32 = arith.constant 0 : i32
    %c0_i32_0 = arith.constant 0 : i32
    %c0_i32_1 = arith.constant 0 : i32
    %c0_i32_2 = arith.constant 0 : i32
    return %c0_i32, %c0_i32_0, %c0_i32_1 : i32, i32, i32
  }
  func.func @transform_3(%arg0: i32) -> (i32, i32) {
    %c0_i32 = arith.constant 0 : i32
    %c0_i32_0 = arith.constant 0 : i32
    %c0_i32_1 = arith.constant 0 : i32
    return %c0_i32, %c0_i32_0 : i32, i32
  }
  func.func @transform_4(%arg0: i32) -> (i32, i32) {
    %c0_i32 = arith.constant 0 : i32
    %c0_i32_0 = arith.constant 0 : i32
    %c0_i32_1 = arith.constant 0 : i32
    return %c0_i32, %c0_i32_0 : i32, i32
  }
  func.func @transform_5(%arg0: i32) -> (i32, i32, i32) {
    %c0_i32 = arith.constant 0 : i32
    %c0_i32_0 = arith.constant 0 : i32
    %c0_i32_1 = arith.constant 0 : i32
    return %arg0, %c0_i32, %c0_i32_0 : i32, i32, i32
  }
}

</mosaic_0001>

<llo_original>
// kernel: residual_block.3
$region0: #{residual_block.3}
  #allocation0 [shape = 'u32[]', space=smem, size = 0x4, offset = 0x4, fixed_abs, tag = 'smem constant byte address 0x4 - core index']
  #allocation1 [shape = 'u32[72,128]{1,0:T(1,128)}', space=vmem, size = 0x9000, scoped, tag = 'internal scratch']
  #allocation2 [shape = 'bf16[1,18,4]{2,1,0:T(8,128)(2,1)}', space=vmem, size = 0x1800, scoped, tag = 'scratch operand']
  %s0 = inlined_call_operand.vmem [shape: bf16[2,16,4], index: 0, kind: input, shape index: {}]
  %s1 = inlined_call_operand.vmem [shape: bf16[3,4,8], index: 1, kind: input, shape index: {}]
  %s2 = inlined_call_operand.vmem [shape: f32[8,8], index: 2, kind: input, shape index: {}]
  %s3 = inlined_call_operand.vmem [shape: f32[2,2,8], index: 3, kind: output, shape index: {}]
  %s4 = sld [smem:[#allocation0]]
  $region45: #{residual_block.3} parent=0
    _
  %s6 = ssub.s32 1, %s4
  %s7 = scalar_select 0, %s6, %s4
  loop: start=0, step=1, limit=4
  $region2: #{residual_block.3} parent=0 // loop_pre_header
    _
  $region3: #{residual_block.3} parent=0 // loop_header
    %s9 = sphi 0, %s13
    %p10 = scmp.ge.s32.totalorder %s9, 4
    %s19 = sphi 0, %s21
    %s22 = sphi 0, %s19
    %s23 = sphi 0, %s22
    %s39 = sphi 0, %s23
    %s43 = sphi 0, %s43
    %s45 = sphi 0, %s43
    %s46 = sphi 0, %s45
    %s60 = sphi 0, %s46
    %s64 = sphi 0, %s64
    %s66 = sphi 0, %s64
    %s67 = sphi 0, %s66
    %s81 = sphi 0, %s67
    %s87 = sphi 0, %s89
    %s90 = sphi 0, %s87
    %s91 = sphi 0, %s90
    %s107 = sphi 0, %s91
  $region4: #{residual_block.3} parent=0 // loop_header_branch
    %12 = sbr.rel (%p10) target = $region8
  $region5: #{residual_block.3} parent=0 // loop_body
    %s14 = ssub.s32 %s9, 1
    %s15 = ssub.s32 %s9, 2
    %s16 = sadd.s32 %s9, 1
    %s17 = ssub.s32 %s9, %s16
    %p18 = scmp.eq.s32.totalorder %s17, 0
    %s20 = sadd.s32 %s19, 1
    %s21 = scalar_select %p18, %s19, %s20
    %p24 = pneg %p18
    %p25 = scmp.eq.s32.totalorder %s9, 1
    %p26 = por %p24, %p25
    %p27 = scmp.ne.s32.totalorder %s19, %s22
    %p28 = scmp.eq.s32.totalorder %s9, 0
    %p29 = por %p27, %p28
    %p30 = scmp.ne.s32.totalorder %s19, %s22
    %p31 = scmp.eq.s32.totalorder %s14, 1
    %p32 = por %p30, %p31
    %p33 = scmp.ne.s32.totalorder %s22, %s23
    %p34 = scmp.eq.s32.totalorder %s14, 0
    %p35 = por %p33, %p34
    %p36 = scmp.ne.s32.totalorder %s22, %s23
    %p37 = scmp.eq.s32.totalorder %s15, 1
    %p38 = por %p36, %p37
    %p40 = scmp.ne.s32.totalorder %s23, %s39
    %p41 = scmp.eq.s32.totalorder %s15, 0
    %p42 = por %p40, %p41
    %s44 = sadd.s32 %s43, 1
    %p47 = scmp.eq.s32.totalorder %s9, 1
    %p48 = scmp.ne.s32.totalorder %s43, %s45
    %p49 = scmp.eq.s32.totalorder %s9, 0
    %p50 = por %p48, %p49
    %p51 = scmp.ne.s32.totalorder %s43, %s45
    %p52 = scmp.eq.s32.totalorder %s14, 1
    %p53 = por %p51, %p52
    %p54 = scmp.ne.s32.totalorder %s45, %s46
    %p55 = scmp.eq.s32.totalorder %s14, 0
    %p56 = por %p54, %p55
    %p57 = scmp.ne.s32.totalorder %s45, %s46
    %p58 = scmp.eq.s32.totalorder %s15, 1
    %p59 = por %p57, %p58
    %p61 = scmp.ne.s32.totalorder %s46, %s60
    %p62 = scmp.eq.s32.totalorder %s15, 0
    %p63 = por %p61, %p62
    %s65 = sadd.s32 %s64, 1
    %p68 = scmp.eq.s32.totalorder %s9, 1
    %p69 = scmp.ne.s32.totalorder %s64, %s66
    %p70 = scmp.eq.s32.totalorder %s9, 0
    %p71 = por %p69, %p70
    %p72 = scmp.ne.s32.totalorder %s64, %s66
    %p73 = scmp.eq.s32.totalorder %s14, 1
    %p74 = por %p72, %p73
    %p75 = scmp.ne.s32.totalorder %s66, %s67
    %p76 = scmp.eq.s32.totalorder %s14, 0
    %p77 = por %p75, %p76
    %p78 = scmp.ne.s32.totalorder %s66, %s67
    %p79 = scmp.eq.s32.totalorder %s15, 1
    %p80 = por %p78, %p79
    %p82 = scmp.ne.s32.totalorder %s67, %s81
    %p83 = scmp.eq.s32.totalorder %s15, 0
    %p84 = por %p82, %p83
    %s85 = ssub.s32 %s9, %s16
    %p86 = scmp.eq.s32.totalorder %s85, 0
    %s88 = sadd.s32 %s87, 1
    %s89 = scalar_select %p86, %s87, %s88
    %p92 = pneg %p86
    %p93 = scmp.eq.s32.totalorder %s9, 1
    %p94 = por %p92, %p93
    %p95 = scmp.ne.s32.totalorder %s87, %s90
    %p96 = scmp.eq.s32.totalorder %s9, 0
    %p97 = por %p95, %p96
    %p98 = scmp.ne.s32.totalorder %s87, %s90
    %p99 = scmp.eq.s32.totalorder %s14, 1
    %p100 = por %p98, %p99
    %p101 = scmp.ne.s32.totalorder %s90, %s91
    %p102 = scmp.eq.s32.totalorder %s14, 0
    %p103 = por %p101, %p102
    %p104 = scmp.ne.s32.totalorder %s90, %s91
    %p105 = scmp.eq.s32.totalorder %s15, 1
    %p106 = por %p104, %p105
    %p108 = scmp.ne.s32.totalorder %s91, %s107
    %p109 = scmp.eq.s32.totalorder %s15, 0
    %p110 = por %p108, %p109
    %p111 = scmp.le.s32.totalorder 1, %s9
    %p112 = scmp.lt.s32.totalorder %s9, 3
    %p113 = pnand %p111, %p112
    %p114 = pneg %p113
    // Predicated region
    $region9: #{residual_block.3} parent=5 // pred_check
      _
    $region10: #{residual_block.3} parent=5 // pred_check_branch
      %116 = sbr.rel (%p113) target = $region12
    $region11: #{residual_block.3} parent=5 // pred_region
      %s117 = ssub.s32 %s9, 1
      // Predicated region
      $region13: #{residual_block.3} parent=11 // pred_check
        %p118 = pneg %p56
      $region14: #{residual_block.3} parent=11 // pred_check_branch
        %120 = sbr.rel (%p118) target = $region16
      $region15: #{residual_block.3} parent=11 // pred_region
        _
      $region16: #{residual_block.3} parent=11 // pred_fallthru
        _
      // Predicated region
      $region17: #{residual_block.3} parent=11 // pred_check
        %p121 = pneg %p77
      $region18: #{residual_block.3} parent=11 // pred_check_branch
        %123 = sbr.rel (%p121) target = $region20
      $region19: #{residual_block.3} parent=11 // pred_region
        _
      $region20: #{residual_block.3} parent=11 // pred_fallthru
        _
    $region12: #{residual_block.3} parent=5 // pred_fallthru
      _
    %p124 = scmp.lt.s32.totalorder %s9, 2
    // Predicated region
    $region21: #{residual_block.3} parent=5 // pred_check
      %p125 = pneg %p124
    $region22: #{residual_block.3} parent=5 // pred_check_branch
      %127 = sbr.rel (%p125) target = $region24
    $region23: #{residual_block.3} parent=5 // pred_region
      // Predicated region
      $region25: #{residual_block.3} parent=23 // pred_check
        %p128 = pneg %p29
      $region26: #{residual_block.3} parent=23 // pred_check_branch
        %130 = sbr.rel (%p128) target = $region28
      $region27: #{residual_block.3} parent=23 // pred_region
        %p131 = scmp.lt.s32.totalorder %s9, 1
        %s132 = scalar_select %p131, %s9, 1
        %s133 = smul.addr %s132, 2
        %s134 = smul.addr %s133, 4
        %s135 = scalar_lea.vmem %s0, %s134
      $region28: #{residual_block.3} parent=23 // pred_fallthru
        _
    $region24: #{residual_block.3} parent=5 // pred_fallthru
      _
    %p136 = scmp.le.s32.totalorder 1, %s9
    %p137 = scmp.lt.s32.totalorder %s9, 3
    %p138 = pnand %p136, %p137
    %p139 = pneg %p138
    // Predicated region
    $region29: #{residual_block.3} parent=5 // pred_check
      _
    $region30: #{residual_block.3} parent=5 // pred_check_branch
      %141 = sbr.rel (%p138) target = $region32
    $region31: #{residual_block.3} parent=5 // pred_region
      %s142 = ssub.s32 %s9, 1
      %p143 = scmp.lt.s32.totalorder %s14, 1
      %s144 = scalar_select %p143, %s14, 1
      %s145 = smul.addr %s144, 2
      %s146 = smul.addr %s145, 4
      %s147 = scalar_lea.vmem %s0, %s146
      %p148 = pneg %p35
      %p149 = pneg %p32
      %p150 = pneg %p56
      %p151 = pneg %p53
      %p152 = pneg %p77
      %p153 = pneg %p74
      %p154 = pneg %p103
      %p155 = pneg %p100
      %p156 = scmp.lt.s32.totalorder %s14, 1
      %s157 = scalar_select %p156, %s14, 1
      %s158 = smul.addr %s157, 2
      %s159 = scalar_lea.vmem %s3, %s158
      %p160 = scmp.lt.s32.totalorder %s14, 1
      %s161 = scalar_select %p160, %s14, 1
      %s162 = smul.addr %s161, 2
      %s163 = smul.addr %s162, 4
      %s164 = scalar_lea.vmem %s0, %s163
      %p165 = scmp.lt.s32.totalorder %s14, 1
      %s166 = scalar_select %p165, %s14, 1
      %s167 = smul.addr %s166, 2
      %s168 = scalar_lea.vmem %s3, %s167
      %v170 = vld [vmem:[%s164] sm:$0xf]
      %v171 = vld [vmem:[%s164 + $0x4] sm:$0xf]
      %vm172 = vcmask 24576
      %vm173 = vsmask.f32 256
      %vm174 = vmand %vm172, %vm173
      %v175 = vld [vmem:[#allocation2] sm:$0x1]
      %v176 = vsel %vm174, 0, %v175
      %177 = vst [vmem:[#allocation2] sm:$0x1] %v176
      %vm178 = vsmask.f32 7938
      %vm179 = vmand %vm172, %vm178
      %v180 = vld [vmem:[#allocation2 + $0x8] sm:$0x1]
      %v181 = vsel %vm179, 0, %v180
      %182 = vst [vmem:[#allocation2 + $0x8] sm:$0x1] %v181
      %vm183 = vsmask.f32 4368
      %vm184 = vmor %vm173, %vm183
      %v186 = vshrl.u32 %v170, 16
      %v188 = vrot.slane %v186, 7
      %v189 = vshll.u32 %v170, 16
      %v191 = vor.u32 %v188, %v189
      %v192 = vrot.slane %v188, 4
      %v194 = vshrl.u32 %v171, 16
      %v196 = vrot.slane %v194, 7
      %v197 = vshll.u32 %v171, 16
      %v199 = vor.u32 %v196, %v197
      %v200 = vsel %vm184, %v192, %v199
      %v201 = vrot.slane %v196, 4
      %vm205 = vcmask 27648
      %vm206 = vmand %vm205, %vm178
      %v207 = vld [vmem:[#allocation2] sm:$0xf]
      %v208 = vsel %vm206, %v191, %v207
      %209 = vst [vmem:[#allocation2] sm:$0xf] %v208
      %vm210 = vcmask 27648
      %211 = vst.msk [vmem:[#allocation2 + $0x4] sm:$0xf] %vm210, %v200
      %v212 = vld [vmem:[#allocation2 + $0x8] sm:$0x1]
      %v213 = vsel %vm174, %v201, %v212
      %214 = vst [vmem:[#allocation2 + $0x8] sm:$0x1] %v213
      %v215 = vld [vmem:[%s2] sm:$0x1]
      %v216 = vld [vmem:[#allocation2] sm:$0xf]
      %v217 = vld [vmem:[#allocation2 + $0x4] sm:$0xf]
      %v218 = vld [vmem:[%s1] sm:$0x3]
      %v219 = vld [vmem:[#allocation2 + $0x8] sm:$0x1]
      %s220 = scalar_lea.vmem %s1, 2
      %v221 = vld [vmem:[%s220] sm:$0x3]
      %v225 = vunpack.c.l.b16 %v216
      %v226 = vunpack.c.l.b16 %v217
      %v227 = vunpack.c.l.b16 %v219
      %v228 = vpack.c.b16 %v226, %v225
      %v229 = vpack.c.b16 %v227, %v227
      %vm230 = vsmask.f32 7424
      %v232 = vshrl.u32 %v228, 16
      %v234 = vshll.u32 %v228, 16
      %v236 = vrot.slane %v234, 1
      %v237 = vor.u32 %v232, %v236
      %v239 = vshll.u32 %v229, 16
      %v241 = vrot.slane %v239, 1
      %v242 = vsel %vm230, %v237, %v241
      %vm243 = vcmask 31744
      %v245 = vsel %vm243, %v242, 0
      %vm247 = vcmask 1041408
      %v249 = vsel %vm247, %v221, 0
      %251 = vmatpush.bf16.msra.mxu0 0
      %252 = vmatpush.bf16.msra.mxu0 0
      %253 = vmatpush.bf16.msra.mxu0 0
      %254 = vmatpush.bf16.msra.mxu0 0
      %255 = vmatpush.bf16.msra.mxu0 0
      %256 = vmatpush.bf16.msra.mxu0 0
      %257 = vmatpush.bf16.msra.mxu0 0
      %258 = vmatpush.bf16.msra.mxu0 %v249
      %259 = vmatmul.bf16.gmra.mxu0 %v245
      %v260 = vpop.f32.mrf.mxu0
      %v261 = vadd.f32 0.0, %v260
      %v262 = vpop.f32.mrf.mxu0
      %v263 = vadd.f32 0.0, %v262
      %264 = vdwg.mxu0
      %v265 = vsel %vm243, %v228, 0
      %v268 = vsel %vm247, %v218, 0
      %270 = vmatpush.bf16.msra.mxu0 0
      %271 = vmatpush.bf16.msra.mxu0 0
      %272 = vmatpush.bf16.msra.mxu0 0
      %273 = vmatpush.bf16.msra.mxu0 0
      %274 = vmatpush.bf16.msra.mxu0 0
      %275 = vmatpush.bf16.msra.mxu0 0
      %276 = vmatpush.bf16.msra.mxu0 0
      %277 = vmatpush.bf16.msra.mxu0 %v268
      %278 = vmatmul.bf16.gmra.mxu0 %v265
      %v279 = vpop.f32.mrf.mxu0
      %v280 = vadd.f32 %v261, %v279
      %v281 = vpop.f32.mrf.mxu0
      %v282 = vadd.f32 %v263, %v281
      %283 = vdwg.mxu0
      %v284 = vld [vmem:[#allocation2] sm:$0xe]
      %s285 = scalar_lea.vmem %s1, 4
      %v286 = vld [vmem:[%s285] sm:$0x3]
      %v288 = vunpack.c.l.b16 %v284
      %v289 = vpack.c.b16 %v226, %v288
      %vm290 = vcmask 1046528
      %v291 = vrot.slane %v289, 1
      %v292 = vrot.slane %v229, 1
      %v293 = vsel %vm290, %v291, %v292
      %v295 = vsel %vm243, %v293, 0
      %v298 = vsel %vm247, %v286, 0
      %300 = vmatpush.bf16.msra.mxu0 0
      %301 = vmatpush.bf16.msra.mxu0 0
      %302 = vmatpush.bf16.msra.mxu0 0
      %303 = vmatpush.bf16.msra.mxu0 0
      %304 = vmatpush.bf16.msra.mxu0 0
      %305 = vmatpush.bf16.msra.mxu0 0
      %306 = vmatpush.bf16.msra.mxu0 0
      %307 = vmatpush.bf16.msra.mxu0 %v298
      %308 = vmatmul.bf16.gmra.mxu0 %v295
      %v309 = vpop.f32.mrf.mxu0
      %v310 = vadd.f32 0.0, %v309
      %v311 = vpop.f32.mrf.mxu0
      %v312 = vadd.f32 0.0, %v311
      %313 = vdwg.mxu0
      %v314 = vadd.f32 %v280, %v310
      %v315 = vadd.f32 %v282, %v312
      %v316 = vperm.slane %v215, 0
      %v317 = vadd.f32 %v314, %v316
      %v318 = vadd.f32 %v315, %v316
      %vm319 = vcmask 64512
      %v320 = vsel %vm319, %v317, 0.0
      %v321 = vsel %vm319, %v318, 0.0
      %v322 = vadd.f32 %v320, %v321
      %v323 = vrot.slane %v322, 4
      %v324 = vadd.f32 %v322, %v323
      %v325 = vrot.slane %v324, 2
      %v326 = vadd.f32 %v324, %v325
      %v327 = vrot.slane %v326, 1
      %v328 = vadd.f32 %v326, %v327
      %v329 = vmul.f32 %v317, %v317
      %v330 = vmul.f32 %v318, %v318
      %v331 = vsel %vm319, %v329, 0.0
      %v332 = vsel %vm319, %v330, 0.0
      %v333 = vadd.f32 %v331, %v332
      %v334 = vrot.slane %v333, 4
      %v335 = vadd.f32 %v333, %v334
      %v336 = vrot.slane %v335, 2
      %v337 = vadd.f32 %v335, %v336
      %v338 = vrot.slane %v337, 1
      %v339 = vadd.f32 %v337, %v338
      %vm340 = vcmask 1040384
      %v341 = vsel %vm340, %v328, %v339
      %vm342 = vcmask 58368
      %343 = vst.msk [vmem:[%s168] sm:$0x3] %vm342, %v341
      %p344 = scmp.lt.s32.totalorder %s14, 1
      %s345 = scalar_select %p344, %s14, 1
      %s346 = smul.addr %s345, 2
      %s347 = scalar_lea.vmem %s3, %s346
      // Predicated region
      $region33: #{residual_block.3} parent=31 // pred_check
        %p348 = pneg %p100
      $region34: #{residual_block.3} parent=31 // pred_check_branch
        %350 = sbr.rel (%p348) target = $region36
      $region35: #{residual_block.3} parent=31 // pred_region
        _
      $region36: #{residual_block.3} parent=31 // pred_fallthru
        _
    $region32: #{residual_block.3} parent=5 // pred_fallthru
      _
    %p351 = scmp.le.s32.totalorder 2, %s9
    // Predicated region
    $region37: #{residual_block.3} parent=5 // pred_check
      %p352 = pneg %p351
    $region38: #{residual_block.3} parent=5 // pred_check_branch
      %354 = sbr.rel (%p352) target = $region40
    $region39: #{residual_block.3} parent=5 // pred_region
      %s355 = ssub.s32 %s9, 2
      // Predicated region
      $region41: #{residual_block.3} parent=39 // pred_check
        %p356 = pneg %p106
      $region42: #{residual_block.3} parent=39 // pred_check_branch
        %358 = sbr.rel (%p356) target = $region44
      $region43: #{residual_block.3} parent=39 // pred_region
        %p359 = scmp.lt.s32.totalorder %s15, 1
        %s360 = scalar_select %p359, %s15, 1
        %s361 = smul.addr %s360, 2
        %s362 = scalar_lea.vmem %s3, %s361
      $region44: #{residual_block.3} parent=39 // pred_fallthru
        _
    $region40: #{residual_block.3} parent=5 // pred_fallthru
      _
  $region6: #{residual_block.3} parent=0 // loop_footer
    %s13 = sadd.s32 1, %s9
  $region7: #{residual_block.3} parent=0 // loop_footer_branch
    %8 = sbr.rel target = $region3
  $region8: #{residual_block.3} parent=0 // loop_exit
    _

// kernel: residual_block.4
$region0: #{residual_block.4}
  #allocation0 [shape = 'u32[]', space=smem, size = 0x4, offset = 0x4, fixed_abs, tag = 'smem constant byte address 0x4 - core index']
  #allocation1 [shape = 'u32[72,128]{1,0:T(1,128)}', space=vmem, size = 0x9000, scoped, tag = 'internal scratch']
  #allocation2 [shape = 'bf16[1,18,4]{2,1,0:T(8,128)(2,1)}', space=vmem, size = 0x1800, scoped, tag = 'scratch operand']
  #allocation3 [shape = 'bf16[1,18,8]{2,1,0:T(8,128)(2,1)}', space=vmem, size = 0x1800, scoped, tag = 'scratch operand']
  %s0 = inlined_call_operand.vmem [shape: bf16[2,16,4], index: 0, kind: input, shape index: {}]
  %s1 = inlined_call_operand.vmem [shape: bf16[3,4,8], index: 1, kind: input, shape index: {}]
  %s2 = inlined_call_operand.vmem [shape: bf16[3,8,8], index: 2, kind: input, shape index: {}]
  %s3 = inlined_call_operand.vmem [shape: f32[8,8], index: 3, kind: input, shape index: {}]
  %s4 = inlined_call_operand.vmem [shape: f32[2,2,8], index: 4, kind: output, shape index: {}]
  %s5 = sld [smem:[#allocation0]]
  $region49: #{residual_block.4} parent=0
    _
  %s7 = ssub.s32 1, %s5
  %s8 = scalar_select 0, %s7, %s5
  loop: start=0, step=1, limit=4
  $region2: #{residual_block.4} parent=0 // loop_pre_header
    _
  $region3: #{residual_block.4} parent=0 // loop_header
    %s10 = sphi 0, %s14
    %p11 = scmp.ge.s32.totalorder %s10, 4
    %s20 = sphi 0, %s22
    %s23 = sphi 0, %s20
    %s24 = sphi 0, %s23
    %s40 = sphi 0, %s24
    %s44 = sphi 0, %s44
    %s46 = sphi 0, %s44
    %s47 = sphi 0, %s46
    %s61 = sphi 0, %s47
    %s65 = sphi 0, %s65
    %s67 = sphi 0, %s65
    %s68 = sphi 0, %s67
    %s82 = sphi 0, %s68
    %s86 = sphi 0, %s86
    %s88 = sphi 0, %s86
    %s89 = sphi 0, %s88
    %s103 = sphi 0, %s89
    %s109 = sphi 0, %s111
    %s112 = sphi 0, %s109
    %s113 = sphi 0, %s112
    %s129 = sphi 0, %s113
  $region4: #{residual_block.4} parent=0 // loop_header_branch
    %13 = sbr.rel (%p11) target = $region8
  $region5: #{residual_block.4} parent=0 // loop_body
    %s15 = ssub.s32 %s10, 1
    %s16 = ssub.s32 %s10, 2
    %s17 = sadd.s32 %s10, 1
    %s18 = ssub.s32 %s10, %s17
    %p19 = scmp.eq.s32.totalorder %s18, 0
    %s21 = sadd.s32 %s20, 1
    %s22 = scalar_select %p19, %s20, %s21
    %p25 = pneg %p19
    %p26 = scmp.eq.s32.totalorder %s10, 1
    %p27 = por %p25, %p26
    %p28 = scmp.ne.s32.totalorder %s20, %s23
    %p29 = scmp.eq.s32.totalorder %s10, 0
    %p30 = por %p28, %p29
    %p31 = scmp.ne.s32.totalorder %s20, %s23
    %p32 = scmp.eq.s32.totalorder %s15, 1
    %p33 = por %p31, %p32
    %p34 = scmp.ne.s32.totalorder %s23, %s24
    %p35 = scmp.eq.s32.totalorder %s15, 0
    %p36 = por %p34, %p35
    %p37 = scmp.ne.s32.totalorder %s23, %s24
    %p38 = scmp.eq.s32.totalorder %s16, 1
    %p39 = por %p37, %p38
    %p41 = scmp.ne.s32.totalorder %s24, %s40
    %p42 = scmp.eq.s32.totalorder %s16, 0
    %p43 = por %p41, %p42
    %s45 = sadd.s32 %s44, 1
    %p48 = scmp.eq.s32.totalorder %s10, 1
    %p49 = scmp.ne.s32.totalorder %s44, %s46
    %p50 = scmp.eq.s32.totalorder %s10, 0
    %p51 = por %p49, %p50
    %p52 = scmp.ne.s32.totalorder %s44, %s46
    %p53 = scmp.eq.s32.totalorder %s15, 1
    %p54 = por %p52, %p53
    %p55 = scmp.ne.s32.totalorder %s46, %s47
    %p56 = scmp.eq.s32.totalorder %s15, 0
    %p57 = por %p55, %p56
    %p58 = scmp.ne.s32.totalorder %s46, %s47
    %p59 = scmp.eq.s32.totalorder %s16, 1
    %p60 = por %p58, %p59
    %p62 = scmp.ne.s32.totalorder %s47, %s61
    %p63 = scmp.eq.s32.totalorder %s16, 0
    %p64 = por %p62, %p63
    %s66 = sadd.s32 %s65, 1
    %p69 = scmp.eq.s32.totalorder %s10, 1
    %p70 = scmp.ne.s32.totalorder %s65, %s67
    %p71 = scmp.eq.s32.totalorder %s10, 0
    %p72 = por %p70, %p71
    %p73 = scmp.ne.s32.totalorder %s65, %s67
    %p74 = scmp.eq.s32.totalorder %s15, 1
    %p75 = por %p73, %p74
    %p76 = scmp.ne.s32.totalorder %s67, %s68
    %p77 = scmp.eq.s32.totalorder %s15, 0
    %p78 = por %p76, %p77
    %p79 = scmp.ne.s32.totalorder %s67, %s68
    %p80 = scmp.eq.s32.totalorder %s16, 1
    %p81 = por %p79, %p80
    %p83 = scmp.ne.s32.totalorder %s68, %s82
    %p84 = scmp.eq.s32.totalorder %s16, 0
    %p85 = por %p83, %p84
    %s87 = sadd.s32 %s86, 1
    %p90 = scmp.eq.s32.totalorder %s10, 1
    %p91 = scmp.ne.s32.totalorder %s86, %s88
    %p92 = scmp.eq.s32.totalorder %s10, 0
    %p93 = por %p91, %p92
    %p94 = scmp.ne.s32.totalorder %s86, %s88
    %p95 = scmp.eq.s32.totalorder %s15, 1
    %p96 = por %p94, %p95
    %p97 = scmp.ne.s32.totalorder %s88, %s89
    %p98 = scmp.eq.s32.totalorder %s15, 0
    %p99 = por %p97, %p98
    %p100 = scmp.ne.s32.totalorder %s88, %s89
    %p101 = scmp.eq.s32.totalorder %s16, 1
    %p102 = por %p100, %p101
    %p104 = scmp.ne.s32.totalorder %s89, %s103
    %p105 = scmp.eq.s32.totalorder %s16, 0
    %p106 = por %p104, %p105
    %s107 = ssub.s32 %s10, %s17
    %p108 = scmp.eq.s32.totalorder %s107, 0
    %s110 = sadd.s32 %s109, 1
    %s111 = scalar_select %p108, %s109, %s110
    %p114 = pneg %p108
    %p115 = scmp.eq.s32.totalorder %s10, 1
    %p116 = por %p114, %p115
    %p117 = scmp.ne.s32.totalorder %s109, %s112
    %p118 = scmp.eq.s32.totalorder %s10, 0
    %p119 = por %p117, %p118
    %p120 = scmp.ne.s32.totalorder %s109, %s112
    %p121 = scmp.eq.s32.totalorder %s15, 1
    %p122 = por %p120, %p121
    %p123 = scmp.ne.s32.totalorder %s112, %s113
    %p124 = scmp.eq.s32.totalorder %s15, 0
    %p125 = por %p123, %p124
    %p126 = scmp.ne.s32.totalorder %s112, %s113
    %p127 = scmp.eq.s32.totalorder %s16, 1
    %p128 = por %p126, %p127
    %p130 = scmp.ne.s32.totalorder %s113, %s129
    %p131 = scmp.eq.s32.totalorder %s16, 0
    %p132 = por %p130, %p131
    %p133 = scmp.le.s32.totalorder 1, %s10
    %p134 = scmp.lt.s32.totalorder %s10, 3
    %p135 = pnand %p133, %p134
    %p136 = pneg %p135
    // Predicated region
    $region9: #{residual_block.4} parent=5 // pred_check
      _
    $region10: #{residual_block.4} parent=5 // pred_check_branch
      %138 = sbr.rel (%p135) target = $region12
    $region11: #{residual_block.4} parent=5 // pred_region
      %s139 = ssub.s32 %s10, 1
      // Predicated region
      $region13: #{residual_block.4} parent=11 // pred_check
        %p140 = pneg %p57
      $region14: #{residual_block.4} parent=11 // pred_check_branch
        %142 = sbr.rel (%p140) target = $region16
      $region15: #{residual_block.4} parent=11 // pred_region
        _
      $region16: #{residual_block.4} parent=11 // pred_fallthru
        _
      // Predicated region
      $region17: #{residual_block.4} parent=11 // pred_check
        %p143 = pneg %p78
      $region18: #{residual_block.4} parent=11 // pred_check_branch
        %145 = sbr.rel (%p143) target = $region20
      $region19: #{residual_block.4} parent=11 // pred_region
        _
      $region20: #{residual_block.4} parent=11 // pred_fallthru
        _
      // Predicated region
      $region21: #{residual_block.4} parent=11 // pred_check
        %p146 = pneg %p99
      $region22: #{residual_block.4} parent=11 // pred_check_branch
        %148 = sbr.rel (%p146) target = $region24
      $region23: #{residual_block.4} parent=11 // pred_region
        _
      $region24: #{residual_block.4} parent=11 // pred_fallthru
        _
    $region12: #{residual_block.4} parent=5 // pred_fallthru
      _
    %p149 = scmp.lt.s32.totalorder %s10, 2
    // Predicated region
    $region25: #{residual_block.4} parent=5 // pred_check
      %p150 = pneg %p149
    $region26: #{residual_block.4} parent=5 // pred_check_branch
      %152 = sbr.rel (%p150) target = $region28
    $region27: #{residual_block.4} parent=5 // pred_region
      // Predicated region
      $region29: #{residual_block.4} parent=27 // pred_check
        %p153 = pneg %p30
      $region30: #{residual_block.4} parent=27 // pred_check_branch
        %155 = sbr.rel (%p153) target = $region32
      $region31: #{residual_block.4} parent=27 // pred_region
        %p156 = scmp.lt.s32.totalorder %s10, 1
        %s157 = scalar_select %p156, %s10, 1
        %s158 = smul.addr %s157, 2
        %s159 = smul.addr %s158, 4
        %s160 = scalar_lea.vmem %s0, %s159
      $region32: #{residual_block.4} parent=27 // pred_fallthru
        _
    $region28: #{residual_block.4} parent=5 // pred_fallthru
      _
    %p161 = scmp.le.s32.totalorder 1, %s10
    %p162 = scmp.lt.s32.totalorder %s10, 3
    %p163 = pnand %p161, %p162
    %p164 = pneg %p163
    // Predicated region
    $region33: #{residual_block.4} parent=5 // pred_check
      _
    $region34: #{residual_block.4} parent=5 // pred_check_branch
      %166 = sbr.rel (%p163) target = $region36
    $region35: #{residual_block.4} parent=5 // pred_region
      %s167 = ssub.s32 %s10, 1
      %p168 = scmp.lt.s32.totalorder %s15, 1
      %s169 = scalar_select %p168, %s15, 1
      %s170 = smul.addr %s169, 2
      %s171 = smul.addr %s170, 4
      %s172 = scalar_lea.vmem %s0, %s171
      %p173 = pneg %p36
      %p174 = pneg %p33
      %p175 = pneg %p57
      %p176 = pneg %p54
      %p177 = pneg %p78
      %p178 = pneg %p75
      %p179 = pneg %p99
      %p180 = pneg %p96
      %p181 = pneg %p125
      %p182 = pneg %p122
      %p183 = scmp.lt.s32.totalorder %s15, 1
      %s184 = scalar_select %p183, %s15, 1
      %s185 = smul.addr %s184, 2
      %s186 = scalar_lea.vmem %s4, %s185
      %p187 = scmp.lt.s32.totalorder %s15, 1
      %s188 = scalar_select %p187, %s15, 1
      %s189 = smul.addr %s188, 2
      %s190 = smul.addr %s189, 4
      %s191 = scalar_lea.vmem %s0, %s190
      %p192 = scmp.lt.s32.totalorder %s15, 1
      %s193 = scalar_select %p192, %s15, 1
      %s194 = smul.addr %s193, 2
      %s195 = scalar_lea.vmem %s4, %s194
      %v197 = vld [vmem:[%s191] sm:$0xf]
      %v198 = vld [vmem:[%s191 + $0x4] sm:$0xf]
      %vm199 = vcmask 24576
      %vm200 = vsmask.f32 256
      %vm201 = vmand %vm199, %vm200
      %v202 = vld [vmem:[#allocation2] sm:$0x1]
      %v203 = vsel %vm201, 0, %v202
      %204 = vst [vmem:[#allocation2] sm:$0x1] %v203
      %vm205 = vsmask.f32 7938
      %vm206 = vmand %vm199, %vm205
      %v207 = vld [vmem:[#allocation2 + $0x8] sm:$0x1]
      %v208 = vsel %vm206, 0, %v207
      %209 = vst [vmem:[#allocation2 + $0x8] sm:$0x1] %v208
      %vm210 = vsmask.f32 4368
      %vm211 = vmor %vm200, %vm210
      %v213 = vshrl.u32 %v197, 16
      %v215 = vrot.slane %v213, 7
      %v216 = vshll.u32 %v197, 16
      %v218 = vor.u32 %v215, %v216
      %v219 = vrot.slane %v215, 4
      %v221 = vshrl.u32 %v198, 16
      %v223 = vrot.slane %v221, 7
      %v224 = vshll.u32 %v198, 16
      %v226 = vor.u32 %v223, %v224
      %v227 = vsel %vm211, %v219, %v226
      %v228 = vrot.slane %v223, 4
      %vm232 = vcmask 27648
      %vm233 = vmand %vm232, %vm205
      %v234 = vld [vmem:[#allocation2] sm:$0xf]
      %v235 = vsel %vm233, %v218, %v234
      %236 = vst [vmem:[#allocation2] sm:$0xf] %v235
      %vm237 = vcmask 27648
      %238 = vst.msk [vmem:[#allocation2 + $0x4] sm:$0xf] %vm237, %v227
      %v239 = vld [vmem:[#allocation2 + $0x8] sm:$0x1]
      %v240 = vsel %vm201, %v228, %v239
      %241 = vst [vmem:[#allocation2 + $0x8] sm:$0x1] %v240
      %v242 = vld [vmem:[%s3] sm:$0x1]
      %v243 = vld [vmem:[#allocation2] sm:$0xf]
      %v244 = vld [vmem:[#allocation2 + $0x4] sm:$0xf]
      %v245 = vld [vmem:[%s1] sm:$0x3]
      %v246 = vld [vmem:[#allocation2 + $0x8] sm:$0x1]
      %s247 = scalar_lea.vmem %s1, 2
      %v248 = vld [vmem:[%s247] sm:$0x3]
      %v252 = vunpack.c.l.b16 %v243
      %v253 = vunpack.c.l.b16 %v244
      %v254 = vunpack.c.l.b16 %v246
      %v255 = vpack.c.b16 %v253, %v252
      %v256 = vpack.c.b16 %v254, %v254
      %vm257 = vsmask.f32 7424
      %v259 = vshrl.u32 %v255, 16
      %v261 = vshll.u32 %v255, 16
      %v263 = vrot.slane %v261, 1
      %v264 = vor.u32 %v259, %v263
      %v266 = vshll.u32 %v256, 16
      %v268 = vrot.slane %v266, 1
      %v269 = vsel %vm257, %v264, %v268
      %vm270 = vcmask 31744
      %v272 = vsel %vm270, %v269, 0
      %vm274 = vcmask 1041408
      %v276 = vsel %vm274, %v248, 0
      %278 = vmatpush.bf16.msra.mxu0 0
      %279 = vmatpush.bf16.msra.mxu0 0
      %280 = vmatpush.bf16.msra.mxu0 0
      %281 = vmatpush.bf16.msra.mxu0 0
      %282 = vmatpush.bf16.msra.mxu0 0
      %283 = vmatpush.bf16.msra.mxu0 0
      %284 = vmatpush.bf16.msra.mxu0 0
      %285 = vmatpush.bf16.msra.mxu0 %v276
      %286 = vmatmul.bf16.gmra.mxu0 %v272
      %v287 = vpop.f32.mrf.mxu0
      %v288 = vadd.f32 0.0, %v287
      %v289 = vpop.f32.mrf.mxu0
      %v290 = vadd.f32 0.0, %v289
      %291 = vdwg.mxu0
      %v292 = vsel %vm270, %v255, 0
      %v295 = vsel %vm274, %v245, 0
      %297 = vmatpush.bf16.msra.mxu0 0
      %298 = vmatpush.bf16.msra.mxu0 0
      %299 = vmatpush.bf16.msra.mxu0 0
      %300 = vmatpush.bf16.msra.mxu0 0
      %301 = vmatpush.bf16.msra.mxu0 0
      %302 = vmatpush.bf16.msra.mxu0 0
      %303 = vmatpush.bf16.msra.mxu0 0
      %304 = vmatpush.bf16.msra.mxu0 %v295
      %305 = vmatmul.bf16.gmra.mxu0 %v292
      %v306 = vpop.f32.mrf.mxu0
      %v307 = vadd.f32 %v288, %v306
      %v308 = vpop.f32.mrf.mxu0
      %v309 = vadd.f32 %v290, %v308
      %310 = vdwg.mxu0
      %v311 = vld [vmem:[#allocation2] sm:$0xe]
      %s312 = scalar_lea.vmem %s1, 4
      %v313 = vld [vmem:[%s312] sm:$0x3]
      %v315 = vunpack.c.l.b16 %v311
      %v316 = vpack.c.b16 %v253, %v315
      %vm317 = vcmask 1046528
      %v318 = vrot.slane %v316, 1
      %v319 = vrot.slane %v256, 1
      %v320 = vsel %vm317, %v318, %v319
      %v322 = vsel %vm270, %v320, 0
      %v325 = vsel %vm274, %v313, 0
      %327 = vmatpush.bf16.msra.mxu0 0
      %328 = vmatpush.bf16.msra.mxu0 0
      %329 = vmatpush.bf16.msra.mxu0 0
      %330 = vmatpush.bf16.msra.mxu0 0
      %331 = vmatpush.bf16.msra.mxu0 0
      %332 = vmatpush.bf16.msra.mxu0 0
      %333 = vmatpush.bf16.msra.mxu0 0
      %334 = vmatpush.bf16.msra.mxu0 %v325
      %335 = vmatmul.bf16.gmra.mxu0 %v322
      %v336 = vpop.f32.mrf.mxu0
      %v337 = vadd.f32 0.0, %v336
      %v338 = vpop.f32.mrf.mxu0
      %v339 = vadd.f32 0.0, %v338
      %340 = vdwg.mxu0
      %v341 = vadd.f32 %v307, %v337
      %v342 = vadd.f32 %v309, %v339
      %v343 = vperm.slane %v242, 0
      %v344 = vadd.f32 %v341, %v343
      %v345 = vadd.f32 %v342, %v343
      %v346 = vld [vmem:[%s3 + $0x3] sm:$0x1]
      %v347 = vperm.slane %v346, 0
      %v348 = vmul.f32 %v344, %v347
      %v349 = vmul.f32 %v345, %v347
      %v350 = vld [vmem:[%s3 + $0x4] sm:$0x1]
      %v351 = vperm.slane %v350, 0
      %v352 = vadd.f32 %v348, %v351
      %v353 = vadd.f32 %v349, %v351
      %v354 = vmax.f32 %v352, 0.0
      %v355 = vmax.f32 %v353, 0.0
      %v356 = vpack.c.bf16 %v354, %v354
      %v357 = vpack.c.bf16 %v355, %v355
      %vm358 = vcmask 57344
      %vm359 = vmand %vm358, %vm200
      %v360 = vld [vmem:[#allocation3] sm:$0x1]
      %v361 = vsel %vm359, 0, %v360
      %362 = vst [vmem:[#allocation3] sm:$0x1] %v361
      %vm363 = vmand %vm358, %vm205
      %v364 = vld [vmem:[#allocation3 + $0x8] sm:$0x1]
      %v365 = vsel %vm363, 0, %v364
      %366 = vst [vmem:[#allocation3 + $0x8] sm:$0x1] %v365
      %v368 = vshrl.u32 %v356, 16
      %v370 = vrot.slane %v368, 7
      %v371 = vshll.u32 %v356, 16
      %v373 = vor.u32 %v370, %v371
      %v374 = vrot.slane %v370, 4
      %v376 = vshrl.u32 %v357, 16
      %v378 = vrot.slane %v376, 7
      %v379 = vshll.u32 %v357, 16
      %v381 = vor.u32 %v378, %v379
      %v382 = vsel %vm211, %v374, %v381
      %v383 = vrot.slane %v378, 4
      %vm387 = vcmask 60416
      %vm388 = vmand %vm387, %vm205
      %v389 = vld [vmem:[#allocation3] sm:$0xf]
      %v390 = vsel %vm388, %v373, %v389
      %391 = vst [vmem:[#allocation3] sm:$0xf] %v390
      %vm392 = vcmask 60416
      %393 = vst.msk [vmem:[#allocation3 + $0x4] sm:$0xf] %vm392, %v382
      %v394 = vld [vmem:[#allocation3 + $0x8] sm:$0x1]
      %v395 = vsel %vm359, %v383, %v394
      %396 = vst [vmem:[#allocation3 + $0x8] sm:$0x1] %v395
      %v397 = vld [vmem:[%s3 + $0x1] sm:$0x1]
      %v398 = vld [vmem:[#allocation3] sm:$0xf]
      %v399 = vld [vmem:[#allocation3 + $0x4] sm:$0xf]
      %v400 = vld [vmem:[%s2] sm:$0xf]
      %v401 = vld [vmem:[#allocation3 + $0x8] sm:$0x1]
      %s402 = scalar_lea.vmem %s2, 4
      %v403 = vld [vmem:[%s402] sm:$0xf]
      %v407 = vunpack.c.l.b16 %v398
      %v408 = vunpack.c.l.b16 %v399
      %v409 = vunpack.c.l.b16 %v401
      %v410 = vpack.c.b16 %v408, %v407
      %v411 = vpack.c.b16 %v409, %v409
      %v413 = vshrl.u32 %v410, 16
      %v415 = vshll.u32 %v410, 16
      %v417 = vrot.slane %v415, 1
      %v418 = vor.u32 %v413, %v417
      %v420 = vshll.u32 %v411, 16
      %v422 = vrot.slane %v420, 1
      %v423 = vsel %vm257, %v418, %v422
      %vm424 = vcmask 64512
      %v426 = vsel %vm424, %v423, 0
      %vm428 = vcmask 1043456
      %v430 = vsel %vm428, %v403, 0
      %432 = vmatpush.bf16.msra.mxu0 0
      %433 = vmatpush.bf16.msra.mxu0 0
      %434 = vmatpush.bf16.msra.mxu0 0
      %435 = vmatpush.bf16.msra.mxu0 0
      %436 = vmatpush.bf16.msra.mxu0 0
      %437 = vmatpush.bf16.msra.mxu0 0
      %438 = vmatpush.bf16.msra.mxu0 0
      %439 = vmatpush.bf16.msra.mxu0 %v430
      %440 = vmatmul.bf16.gmra.mxu0 %v426
      %v441 = vpop.f32.mrf.mxu0
      %v442 = vadd.f32 0.0, %v441
      %v443 = vpop.f32.mrf.mxu0
      %v444 = vadd.f32 0.0, %v443
      %445 = vdwg.mxu0
      %v446 = vsel %vm424, %v410, 0
      %v449 = vsel %vm428, %v400, 0
      %451 = vmatpush.bf16.msra.mxu0 0
      %452 = vmatpush.bf16.msra.mxu0 0
      %453 = vmatpush.bf16.msra.mxu0 0
      %454 = vmatpush.bf16.msra.mxu0 0
      %455 = vmatpush.bf16.msra.mxu0 0
      %456 = vmatpush.bf16.msra.mxu0 0
      %457 = vmatpush.bf16.msra.mxu0 0
      %458 = vmatpush.bf16.msra.mxu0 %v449
      %459 = vmatmul.bf16.gmra.mxu0 %v446
      %v460 = vpop.f32.mrf.mxu0
      %v461 = vadd.f32 %v442, %v460
      %v462 = vpop.f32.mrf.mxu0
      %v463 = vadd.f32 %v444, %v462
      %464 = vdwg.mxu0
      %v465 = vld [vmem:[#allocation3] sm:$0xe]
      %s466 = scalar_lea.vmem %s2, 8
      %v467 = vld [vmem:[%s466] sm:$0xf]
      %v469 = vunpack.c.l.b16 %v465
      %v470 = vpack.c.b16 %v408, %v469
      %v471 = vrot.slane %v470, 1
      %v472 = vrot.slane %v411, 1
      %v473 = vsel %vm317, %v471, %v472
      %v475 = vsel %vm424, %v473, 0
      %v478 = vsel %vm428, %v467, 0
      %480 = vmatpush.bf16.msra.mxu0 0
      %481 = vmatpush.bf16.msra.mxu0 0
      %482 = vmatpush.bf16.msra.mxu0 0
      %483 = vmatpush.bf16.msra.mxu0 0
      %484 = vmatpush.bf16.msra.mxu0 0
      %485 = vmatpush.bf16.msra.mxu0 0
      %486 = vmatpush.bf16.msra.mxu0 0
      %487 = vmatpush.bf16.msra.mxu0 %v478
      %488 = vmatmul.bf16.gmra.mxu0 %v475
      %v489 = vpop.f32.mrf.mxu0
      %v490 = vadd.f32 0.0, %v489
      %v491 = vpop.f32.mrf.mxu0
      %v492 = vadd.f32 0.0, %v491
      %493 = vdwg.mxu0
      %v494 = vadd.f32 %v461, %v490
      %v495 = vadd.f32 %v463, %v492
      %v496 = vperm.slane %v397, 0
      %v497 = vadd.f32 %v494, %v496
      %v498 = vadd.f32 %v495, %v496
      %v499 = vsel %vm424, %v497, 0.0
      %v500 = vsel %vm424, %v498, 0.0
      %v501 = vadd.f32 %v499, %v500
      %v502 = vrot.slane %v501, 4
      %v503 = vadd.f32 %v501, %v502
      %v504 = vrot.slane %v503, 2
      %v505 = vadd.f32 %v503, %v504
      %v506 = vrot.slane %v505, 1
      %v507 = vadd.f32 %v505, %v506
      %v508 = vmul.f32 %v497, %v497
      %v509 = vmul.f32 %v498, %v498
      %v510 = vsel %vm424, %v508, 0.0
      %v511 = vsel %vm424, %v509, 0.0
      %v512 = vadd.f32 %v510, %v511
      %v513 = vrot.slane %v512, 4
      %v514 = vadd.f32 %v512, %v513
      %v515 = vrot.slane %v514, 2
      %v516 = vadd.f32 %v514, %v515
      %v517 = vrot.slane %v516, 1
      %v518 = vadd.f32 %v516, %v517
      %vm519 = vcmask 1040384
      %v520 = vsel %vm519, %v507, %v518
      %vm521 = vcmask 58368
      %522 = vst.msk [vmem:[%s195] sm:$0x3] %vm521, %v520
      %p523 = scmp.lt.s32.totalorder %s15, 1
      %s524 = scalar_select %p523, %s15, 1
      %s525 = smul.addr %s524, 2
      %s526 = scalar_lea.vmem %s4, %s525
      // Predicated region
      $region37: #{residual_block.4} parent=35 // pred_check
        %p527 = pneg %p122
      $region38: #{residual_block.4} parent=35 // pred_check_branch
        %529 = sbr.rel (%p527) target = $region40
      $region39: #{residual_block.4} parent=35 // pred_region
        _
      $region40: #{residual_block.4} parent=35 // pred_fallthru
        _
    $region36: #{residual_block.4} parent=5 // pred_fallthru
      _
    %p530 = scmp.le.s32.totalorder 2, %s10
    // Predicated region
    $region41: #{residual_block.4} parent=5 // pred_check
      %p531 = pneg %p530
    $region42: #{residual_block.4} parent=5 // pred_check_branch
      %533 = sbr.rel (%p531) target = $region44
    $region43: #{residual_block.4} parent=5 // pred_region
      %s534 = ssub.s32 %s10, 2
      // Predicated region
      $region45: #{residual_block.4} parent=43 // pred_check
        %p535 = pneg %p128
      $region46: #{residual_block.4} parent=43 // pred_check_branch
        %537 = sbr.rel (%p535) target = $region48
      $region47: #{residual_block.4} parent=43 // pred_region
        %p538 = scmp.lt.s32.totalorder %s16, 1
        %s539 = scalar_select %p538, %s16, 1
        %s540 = smul.addr %s539, 2
        %s541 = scalar_lea.vmem %s4, %s540
      $region48: #{residual_block.4} parent=43 // pred_fallthru
        _
    $region44: #{residual_block.4} parent=5 // pred_fallthru
      _
  $region6: #{residual_block.4} parent=0 // loop_footer
    %s14 = sadd.s32 1, %s10
  $region7: #{residual_block.4} parent=0 // loop_footer_branch
    %9 = sbr.rel target = $region3
  $region8: #{residual_block.4} parent=0 // loop_exit
    _

// kernel: residual_block.5
$region0: #{residual_block.5}
  #allocation0 [shape = 'u32[]', space=smem, size = 0x4, offset = 0x4, fixed_abs, tag = 'smem constant byte address 0x4 - core index']
  #allocation1 [shape = 'u32[72,128]{1,0:T(1,128)}', space=vmem, size = 0x9000, scoped, tag = 'internal scratch']
  #allocation2 [shape = 'bf16[1,18,4]{2,1,0:T(8,128)(2,1)}', space=vmem, size = 0x1800, scoped, tag = 'scratch operand']
  #allocation3 [shape = 'bf16[1,18,8]{2,1,0:T(8,128)(2,1)}', space=vmem, size = 0x1800, scoped, tag = 'scratch operand']
  %s0 = inlined_call_operand.vmem [shape: bf16[2,16,4], index: 0, kind: input, shape index: {}]
  %s1 = inlined_call_operand.vmem [shape: bf16[3,4,8], index: 1, kind: input, shape index: {}]
  %s2 = inlined_call_operand.vmem [shape: bf16[3,8,8], index: 2, kind: input, shape index: {}]
  %s3 = inlined_call_operand.vmem [shape: bf16[4,8], index: 3, kind: input, shape index: {}]
  %s4 = inlined_call_operand.vmem [shape: f32[8,8], index: 4, kind: input, shape index: {}]
  %s5 = inlined_call_operand.vmem [shape: f32[2,16,8], index: 5, kind: output, shape index: {}]
  %s6 = sld [smem:[#allocation0]]
  $region53: #{residual_block.5} parent=0
    _
  %s8 = ssub.s32 1, %s6
  %s9 = scalar_select 0, %s8, %s6
  loop: start=0, step=1, limit=4
  $region2: #{residual_block.5} parent=0 // loop_pre_header
    _
  $region3: #{residual_block.5} parent=0 // loop_header
    %s11 = sphi 0, %s15
    %p12 = scmp.ge.s32.totalorder %s11, 4
    %s21 = sphi 0, %s23
    %s24 = sphi 0, %s21
    %s25 = sphi 0, %s24
    %s41 = sphi 0, %s25
    %s45 = sphi 0, %s45
    %s47 = sphi 0, %s45
    %s48 = sphi 0, %s47
    %s62 = sphi 0, %s48
    %s66 = sphi 0, %s66
    %s68 = sphi 0, %s66
    %s69 = sphi 0, %s68
    %s83 = sphi 0, %s69
    %s87 = sphi 0, %s87
    %s89 = sphi 0, %s87
    %s90 = sphi 0, %s89
    %s104 = sphi 0, %s90
    %s108 = sphi 0, %s108
    %s110 = sphi 0, %s108
    %s111 = sphi 0, %s110
    %s125 = sphi 0, %s111
    %s131 = sphi 0, %s133
    %s134 = sphi 0, %s131
    %s135 = sphi 0, %s134
    %s151 = sphi 0, %s135
  $region4: #{residual_block.5} parent=0 // loop_header_branch
    %14 = sbr.rel (%p12) target = $region8
  $region5: #{residual_block.5} parent=0 // loop_body
    %s16 = ssub.s32 %s11, 1
    %s17 = ssub.s32 %s11, 2
    %s18 = sadd.s32 %s11, 1
    %s19 = ssub.s32 %s11, %s18
    %p20 = scmp.eq.s32.totalorder %s19, 0
    %s22 = sadd.s32 %s21, 1
    %s23 = scalar_select %p20, %s21, %s22
    %p26 = pneg %p20
    %p27 = scmp.eq.s32.totalorder %s11, 1
    %p28 = por %p26, %p27
    %p29 = scmp.ne.s32.totalorder %s21, %s24
    %p30 = scmp.eq.s32.totalorder %s11, 0
    %p31 = por %p29, %p30
    %p32 = scmp.ne.s32.totalorder %s21, %s24
    %p33 = scmp.eq.s32.totalorder %s16, 1
    %p34 = por %p32, %p33
    %p35 = scmp.ne.s32.totalorder %s24, %s25
    %p36 = scmp.eq.s32.totalorder %s16, 0
    %p37 = por %p35, %p36
    %p38 = scmp.ne.s32.totalorder %s24, %s25
    %p39 = scmp.eq.s32.totalorder %s17, 1
    %p40 = por %p38, %p39
    %p42 = scmp.ne.s32.totalorder %s25, %s41
    %p43 = scmp.eq.s32.totalorder %s17, 0
    %p44 = por %p42, %p43
    %s46 = sadd.s32 %s45, 1
    %p49 = scmp.eq.s32.totalorder %s11, 1
    %p50 = scmp.ne.s32.totalorder %s45, %s47
    %p51 = scmp.eq.s32.totalorder %s11, 0
    %p52 = por %p50, %p51
    %p53 = scmp.ne.s32.totalorder %s45, %s47
    %p54 = scmp.eq.s32.totalorder %s16, 1
    %p55 = por %p53, %p54
    %p56 = scmp.ne.s32.totalorder %s47, %s48
    %p57 = scmp.eq.s32.totalorder %s16, 0
    %p58 = por %p56, %p57
    %p59 = scmp.ne.s32.totalorder %s47, %s48
    %p60 = scmp.eq.s32.totalorder %s17, 1
    %p61 = por %p59, %p60
    %p63 = scmp.ne.s32.totalorder %s48, %s62
    %p64 = scmp.eq.s32.totalorder %s17, 0
    %p65 = por %p63, %p64
    %s67 = sadd.s32 %s66, 1
    %p70 = scmp.eq.s32.totalorder %s11, 1
    %p71 = scmp.ne.s32.totalorder %s66, %s68
    %p72 = scmp.eq.s32.totalorder %s11, 0
    %p73 = por %p71, %p72
    %p74 = scmp.ne.s32.totalorder %s66, %s68
    %p75 = scmp.eq.s32.totalorder %s16, 1
    %p76 = por %p74, %p75
    %p77 = scmp.ne.s32.totalorder %s68, %s69
    %p78 = scmp.eq.s32.totalorder %s16, 0
    %p79 = por %p77, %p78
    %p80 = scmp.ne.s32.totalorder %s68, %s69
    %p81 = scmp.eq.s32.totalorder %s17, 1
    %p82 = por %p80, %p81
    %p84 = scmp.ne.s32.totalorder %s69, %s83
    %p85 = scmp.eq.s32.totalorder %s17, 0
    %p86 = por %p84, %p85
    %s88 = sadd.s32 %s87, 1
    %p91 = scmp.eq.s32.totalorder %s11, 1
    %p92 = scmp.ne.s32.totalorder %s87, %s89
    %p93 = scmp.eq.s32.totalorder %s11, 0
    %p94 = por %p92, %p93
    %p95 = scmp.ne.s32.totalorder %s87, %s89
    %p96 = scmp.eq.s32.totalorder %s16, 1
    %p97 = por %p95, %p96
    %p98 = scmp.ne.s32.totalorder %s89, %s90
    %p99 = scmp.eq.s32.totalorder %s16, 0
    %p100 = por %p98, %p99
    %p101 = scmp.ne.s32.totalorder %s89, %s90
    %p102 = scmp.eq.s32.totalorder %s17, 1
    %p103 = por %p101, %p102
    %p105 = scmp.ne.s32.totalorder %s90, %s104
    %p106 = scmp.eq.s32.totalorder %s17, 0
    %p107 = por %p105, %p106
    %s109 = sadd.s32 %s108, 1
    %p112 = scmp.eq.s32.totalorder %s11, 1
    %p113 = scmp.ne.s32.totalorder %s108, %s110
    %p114 = scmp.eq.s32.totalorder %s11, 0
    %p115 = por %p113, %p114
    %p116 = scmp.ne.s32.totalorder %s108, %s110
    %p117 = scmp.eq.s32.totalorder %s16, 1
    %p118 = por %p116, %p117
    %p119 = scmp.ne.s32.totalorder %s110, %s111
    %p120 = scmp.eq.s32.totalorder %s16, 0
    %p121 = por %p119, %p120
    %p122 = scmp.ne.s32.totalorder %s110, %s111
    %p123 = scmp.eq.s32.totalorder %s17, 1
    %p124 = por %p122, %p123
    %p126 = scmp.ne.s32.totalorder %s111, %s125
    %p127 = scmp.eq.s32.totalorder %s17, 0
    %p128 = por %p126, %p127
    %s129 = ssub.s32 %s11, %s18
    %p130 = scmp.eq.s32.totalorder %s129, 0
    %s132 = sadd.s32 %s131, 1
    %s133 = scalar_select %p130, %s131, %s132
    %p136 = pneg %p130
    %p137 = scmp.eq.s32.totalorder %s11, 1
    %p138 = por %p136, %p137
    %p139 = scmp.ne.s32.totalorder %s131, %s134
    %p140 = scmp.eq.s32.totalorder %s11, 0
    %p141 = por %p139, %p140
    %p142 = scmp.ne.s32.totalorder %s131, %s134
    %p143 = scmp.eq.s32.totalorder %s16, 1
    %p144 = por %p142, %p143
    %p145 = scmp.ne.s32.totalorder %s134, %s135
    %p146 = scmp.eq.s32.totalorder %s16, 0
    %p147 = por %p145, %p146
    %p148 = scmp.ne.s32.totalorder %s134, %s135
    %p149 = scmp.eq.s32.totalorder %s17, 1
    %p150 = por %p148, %p149
    %p152 = scmp.ne.s32.totalorder %s135, %s151
    %p153 = scmp.eq.s32.totalorder %s17, 0
    %p154 = por %p152, %p153
    %p155 = scmp.le.s32.totalorder 1, %s11
    %p156 = scmp.lt.s32.totalorder %s11, 3
    %p157 = pnand %p155, %p156
    %p158 = pneg %p157
    // Predicated region
    $region9: #{residual_block.5} parent=5 // pred_check
      _
    $region10: #{residual_block.5} parent=5 // pred_check_branch
      %160 = sbr.rel (%p157) target = $region12
    $region11: #{residual_block.5} parent=5 // pred_region
      %s161 = ssub.s32 %s11, 1
      // Predicated region
      $region13: #{residual_block.5} parent=11 // pred_check
        %p162 = pneg %p58
      $region14: #{residual_block.5} parent=11 // pred_check_branch
        %164 = sbr.rel (%p162) target = $region16
      $region15: #{residual_block.5} parent=11 // pred_region
        _
      $region16: #{residual_block.5} parent=11 // pred_fallthru
        _
      // Predicated region
      $region17: #{residual_block.5} parent=11 // pred_check
        %p165 = pneg %p79
      $region18: #{residual_block.5} parent=11 // pred_check_branch
        %167 = sbr.rel (%p165) target = $region20
      $region19: #{residual_block.5} parent=11 // pred_region
        _
      $region20: #{residual_block.5} parent=11 // pred_fallthru
        _
      // Predicated region
      $region21: #{residual_block.5} parent=11 // pred_check
        %p168 = pneg %p100
      $region22: #{residual_block.5} parent=11 // pred_check_branch
        %170 = sbr.rel (%p168) target = $region24
      $region23: #{residual_block.5} parent=11 // pred_region
        _
      $region24: #{residual_block.5} parent=11 // pred_fallthru
        _
      // Predicated region
      $region25: #{residual_block.5} parent=11 // pred_check
        %p171 = pneg %p121
      $region26: #{residual_block.5} parent=11 // pred_check_branch
        %173 = sbr.rel (%p171) target = $region28
      $region27: #{residual_block.5} parent=11 // pred_region
        _
      $region28: #{residual_block.5} parent=11 // pred_fallthru
        _
    $region12: #{residual_block.5} parent=5 // pred_fallthru
      _
    %p174 = scmp.lt.s32.totalorder %s11, 2
    // Predicated region
    $region29: #{residual_block.5} parent=5 // pred_check
      %p175 = pneg %p174
    $region30: #{residual_block.5} parent=5 // pred_check_branch
      %177 = sbr.rel (%p175) target = $region32
    $region31: #{residual_block.5} parent=5 // pred_region
      // Predicated region
      $region33: #{residual_block.5} parent=31 // pred_check
        %p178 = pneg %p31
      $region34: #{residual_block.5} parent=31 // pred_check_branch
        %180 = sbr.rel (%p178) target = $region36
      $region35: #{residual_block.5} parent=31 // pred_region
        %p181 = scmp.lt.s32.totalorder %s11, 1
        %s182 = scalar_select %p181, %s11, 1
        %s183 = smul.addr %s182, 2
        %s184 = smul.addr %s183, 4
        %s185 = scalar_lea.vmem %s0, %s184
      $region36: #{residual_block.5} parent=31 // pred_fallthru
        _
    $region32: #{residual_block.5} parent=5 // pred_fallthru
      _
    %p186 = scmp.le.s32.totalorder 1, %s11
    %p187 = scmp.lt.s32.totalorder %s11, 3
    %p188 = pnand %p186, %p187
    %p189 = pneg %p188
    // Predicated region
    $region37: #{residual_block.5} parent=5 // pred_check
      _
    $region38: #{residual_block.5} parent=5 // pred_check_branch
      %191 = sbr.rel (%p188) target = $region40
    $region39: #{residual_block.5} parent=5 // pred_region
      %s192 = ssub.s32 %s11, 1
      %p193 = scmp.lt.s32.totalorder %s16, 1
      %s194 = scalar_select %p193, %s16, 1
      %s195 = smul.addr %s194, 2
      %s196 = smul.addr %s195, 4
      %s197 = scalar_lea.vmem %s0, %s196
      %p198 = pneg %p37
      %p199 = pneg %p34
      %p200 = pneg %p58
      %p201 = pneg %p55
      %p202 = pneg %p79
      %p203 = pneg %p76
      %p204 = pneg %p100
      %p205 = pneg %p97
      %p206 = pneg %p121
      %p207 = pneg %p118
      %p208 = pneg %p147
      %p209 = pneg %p144
      %p210 = scmp.lt.s32.totalorder %s16, 1
      %s211 = scalar_select %p210, %s16, 1
      %s212 = smul.addr %s211, 2
      %s213 = smul.addr %s212, 8
      %s214 = scalar_lea.vmem %s5, %s213
      %p215 = scmp.lt.s32.totalorder %s16, 1
      %s216 = scalar_select %p215, %s16, 1
      %s217 = smul.addr %s216, 2
      %s218 = smul.addr %s217, 4
      %s219 = scalar_lea.vmem %s0, %s218
      %p220 = scmp.lt.s32.totalorder %s16, 1
      %s221 = scalar_select %p220, %s16, 1
      %s222 = smul.addr %s221, 2
      %s223 = smul.addr %s222, 8
      %s224 = scalar_lea.vmem %s5, %s223
      %v226 = vld [vmem:[%s219] sm:$0xf]
      %v227 = vld [vmem:[%s219 + $0x4] sm:$0xf]
      %vm228 = vcmask 24576
      %vm229 = vsmask.f32 256
      %vm230 = vmand %vm228, %vm229
      %v231 = vld [vmem:[#allocation2] sm:$0x1]
      %v232 = vsel %vm230, 0, %v231
      %233 = vst [vmem:[#allocation2] sm:$0x1] %v232
      %vm234 = vsmask.f32 7938
      %vm235 = vmand %vm228, %vm234
      %v236 = vld [vmem:[#allocation2 + $0x8] sm:$0x1]
      %v237 = vsel %vm235, 0, %v236
      %238 = vst [vmem:[#allocation2 + $0x8] sm:$0x1] %v237
      %vm239 = vsmask.f32 4368
      %vm240 = vmor %vm229, %vm239
      %v242 = vshrl.u32 %v226, 16
      %v244 = vrot.slane %v242, 7
      %v245 = vshll.u32 %v226, 16
      %v247 = vor.u32 %v244, %v245
      %v248 = vrot.slane %v244, 4
      %v250 = vshrl.u32 %v227, 16
      %v252 = vrot.slane %v250, 7
      %v253 = vshll.u32 %v227, 16
      %v255 = vor.u32 %v252, %v253
      %v256 = vsel %vm240, %v248, %v255
      %v257 = vrot.slane %v252, 4
      %vm261 = vcmask 27648
      %vm262 = vmand %vm261, %vm234
      %v263 = vld [vmem:[#allocation2] sm:$0xf]
      %v264 = vsel %vm262, %v247, %v263
      %265 = vst [vmem:[#allocation2] sm:$0xf] %v264
      %vm266 = vcmask 27648
      %267 = vst.msk [vmem:[#allocation2 + $0x4] sm:$0xf] %vm266, %v256
      %v268 = vld [vmem:[#allocation2 + $0x8] sm:$0x1]
      %v269 = vsel %vm230, %v257, %v268
      %270 = vst [vmem:[#allocation2 + $0x8] sm:$0x1] %v269
      %v271 = vld [vmem:[%s4] sm:$0x1]
      %v272 = vld [vmem:[#allocation2] sm:$0xf]
      %v273 = vld [vmem:[#allocation2 + $0x4] sm:$0xf]
      %v274 = vld [vmem:[%s1] sm:$0x3]
      %v275 = vld [vmem:[#allocation2 + $0x8] sm:$0x1]
      %s276 = scalar_lea.vmem %s1, 2
      %v277 = vld [vmem:[%s276] sm:$0x3]
      %v281 = vunpack.c.l.b16 %v272
      %v282 = vunpack.c.l.b16 %v273
      %v283 = vunpack.c.l.b16 %v275
      %v284 = vpack.c.b16 %v282, %v281
      %v285 = vpack.c.b16 %v283, %v283
      %vm286 = vsmask.f32 7424
      %v288 = vshrl.u32 %v284, 16
      %v290 = vshll.u32 %v284, 16
      %v292 = vrot.slane %v290, 1
      %v293 = vor.u32 %v288, %v292
      %v295 = vshll.u32 %v285, 16
      %v297 = vrot.slane %v295, 1
      %v298 = vsel %vm286, %v293, %v297
      %vm299 = vcmask 31744
      %v301 = vsel %vm299, %v298, 0
      %vm303 = vcmask 1041408
      %v305 = vsel %vm303, %v277, 0
      %307 = vmatpush.bf16.msra.mxu0 0
      %308 = vmatpush.bf16.msra.mxu0 0
      %309 = vmatpush.bf16.msra.mxu0 0
      %310 = vmatpush.bf16.msra.mxu0 0
      %311 = vmatpush.bf16.msra.mxu0 0
      %312 = vmatpush.bf16.msra.mxu0 0
      %313 = vmatpush.bf16.msra.mxu0 0
      %314 = vmatpush.bf16.msra.mxu0 %v305
      %315 = vmatmul.bf16.gmra.mxu0 %v301
      %v316 = vpop.f32.mrf.mxu0
      %v317 = vadd.f32 0.0, %v316
      %v318 = vpop.f32.mrf.mxu0
      %v319 = vadd.f32 0.0, %v318
      %320 = vdwg.mxu0
      %v321 = vsel %vm299, %v284, 0
      %v324 = vsel %vm303, %v274, 0
      %326 = vmatpush.bf16.msra.mxu0 0
      %327 = vmatpush.bf16.msra.mxu0 0
      %328 = vmatpush.bf16.msra.mxu0 0
      %329 = vmatpush.bf16.msra.mxu0 0
      %330 = vmatpush.bf16.msra.mxu0 0
      %331 = vmatpush.bf16.msra.mxu0 0
      %332 = vmatpush.bf16.msra.mxu0 0
      %333 = vmatpush.bf16.msra.mxu0 %v324
      %334 = vmatmul.bf16.gmra.mxu0 %v321
      %v335 = vpop.f32.mrf.mxu0
      %v336 = vadd.f32 %v317, %v335
      %v337 = vpop.f32.mrf.mxu0
      %v338 = vadd.f32 %v319, %v337
      %339 = vdwg.mxu0
      %v340 = vld [vmem:[#allocation2] sm:$0xe]
      %s341 = scalar_lea.vmem %s1, 4
      %v342 = vld [vmem:[%s341] sm:$0x3]
      %v344 = vunpack.c.l.b16 %v340
      %v345 = vpack.c.b16 %v282, %v344
      %vm346 = vcmask 1046528
      %v347 = vrot.slane %v345, 1
      %v348 = vrot.slane %v285, 1
      %v349 = vsel %vm346, %v347, %v348
      %v351 = vsel %vm299, %v349, 0
      %v354 = vsel %vm303, %v342, 0
      %356 = vmatpush.bf16.msra.mxu0 0
      %357 = vmatpush.bf16.msra.mxu0 0
      %358 = vmatpush.bf16.msra.mxu0 0
      %359 = vmatpush.bf16.msra.mxu0 0
      %360 = vmatpush.bf16.msra.mxu0 0
      %361 = vmatpush.bf16.msra.mxu0 0
      %362 = vmatpush.bf16.msra.mxu0 0
      %363 = vmatpush.bf16.msra.mxu0 %v354
      %364 = vmatmul.bf16.gmra.mxu0 %v351
      %v365 = vpop.f32.mrf.mxu0
      %v366 = vadd.f32 0.0, %v365
      %v367 = vpop.f32.mrf.mxu0
      %v368 = vadd.f32 0.0, %v367
      %369 = vdwg.mxu0
      %v370 = vadd.f32 %v336, %v366
      %v371 = vadd.f32 %v338, %v368
      %v372 = vperm.slane %v271, 0
      %v373 = vadd.f32 %v370, %v372
      %v374 = vadd.f32 %v371, %v372
      %v375 = vld [vmem:[%s4 + $0x3] sm:$0x1]
      %v376 = vperm.slane %v375, 0
      %v377 = vmul.f32 %v373, %v376
      %v378 = vmul.f32 %v374, %v376
      %v379 = vld [vmem:[%s4 + $0x4] sm:$0x1]
      %v380 = vperm.slane %v379, 0
      %v381 = vadd.f32 %v377, %v380
      %v382 = vadd.f32 %v378, %v380
      %v383 = vmax.f32 %v381, 0.0
      %v384 = vmax.f32 %v382, 0.0
      %v385 = vpack.c.bf16 %v383, %v383
      %v386 = vpack.c.bf16 %v384, %v384
      %vm387 = vcmask 57344
      %vm388 = vmand %vm387, %vm229
      %v389 = vld [vmem:[#allocation3] sm:$0x1]
      %v390 = vsel %vm388, 0, %v389
      %391 = vst [vmem:[#allocation3] sm:$0x1] %v390
      %vm392 = vmand %vm387, %vm234
      %v393 = vld [vmem:[#allocation3 + $0x8] sm:$0x1]
      %v394 = vsel %vm392, 0, %v393
      %395 = vst [vmem:[#allocation3 + $0x8] sm:$0x1] %v394
      %v397 = vshrl.u32 %v385, 16
      %v399 = vrot.slane %v397, 7
      %v400 = vshll.u32 %v385, 16
      %v402 = vor.u32 %v399, %v400
      %v403 = vrot.slane %v399, 4
      %v405 = vshrl.u32 %v386, 16
      %v407 = vrot.slane %v405, 7
      %v408 = vshll.u32 %v386, 16
      %v410 = vor.u32 %v407, %v408
      %v411 = vsel %vm240, %v403, %v410
      %v412 = vrot.slane %v407, 4
      %vm416 = vcmask 60416
      %vm417 = vmand %vm416, %vm234
      %v418 = vld [vmem:[#allocation3] sm:$0xf]
      %v419 = vsel %vm417, %v402, %v418
      %420 = vst [vmem:[#allocation3] sm:$0xf] %v419
      %vm421 = vcmask 60416
      %422 = vst.msk [vmem:[#allocation3 + $0x4] sm:$0xf] %vm421, %v411
      %v423 = vld [vmem:[#allocation3 + $0x8] sm:$0x1]
      %v424 = vsel %vm388, %v412, %v423
      %425 = vst [vmem:[#allocation3 + $0x8] sm:$0x1] %v424
      %v426 = vld [vmem:[%s4 + $0x1] sm:$0x1]
      %v427 = vld [vmem:[#allocation3] sm:$0xf]
      %v428 = vld [vmem:[#allocation3 + $0x4] sm:$0xf]
      %v429 = vld [vmem:[%s2] sm:$0xf]
      %v430 = vld [vmem:[#allocation3 + $0x8] sm:$0x1]
      %s431 = scalar_lea.vmem %s2, 4
      %v432 = vld [vmem:[%s431] sm:$0xf]
      %v436 = vunpack.c.l.b16 %v427
      %v437 = vunpack.c.l.b16 %v428
      %v438 = vunpack.c.l.b16 %v430
      %v439 = vpack.c.b16 %v437, %v436
      %v440 = vpack.c.b16 %v438, %v438
      %v442 = vshrl.u32 %v439, 16
      %v444 = vshll.u32 %v439, 16
      %v446 = vrot.slane %v444, 1
      %v447 = vor.u32 %v442, %v446
      %v449 = vshll.u32 %v440, 16
      %v451 = vrot.slane %v449, 1
      %v452 = vsel %vm286, %v447, %v451
      %vm453 = vcmask 64512
      %v455 = vsel %vm453, %v452, 0
      %vm457 = vcmask 1043456
      %v459 = vsel %vm457, %v432, 0
      %461 = vmatpush.bf16.msra.mxu0 0
      %462 = vmatpush.bf16.msra.mxu0 0
      %463 = vmatpush.bf16.msra.mxu0 0
      %464 = vmatpush.bf16.msra.mxu0 0
      %465 = vmatpush.bf16.msra.mxu0 0
      %466 = vmatpush.bf16.msra.mxu0 0
      %467 = vmatpush.bf16.msra.mxu0 0
      %468 = vmatpush.bf16.msra.mxu0 %v459
      %469 = vmatmul.bf16.gmra.mxu0 %v455
      %v470 = vpop.f32.mrf.mxu0
      %v471 = vadd.f32 0.0, %v470
      %v472 = vpop.f32.mrf.mxu0
      %v473 = vadd.f32 0.0, %v472
      %474 = vdwg.mxu0
      %v475 = vsel %vm453, %v439, 0
      %v478 = vsel %vm457, %v429, 0
      %480 = vmatpush.bf16.msra.mxu0 0
      %481 = vmatpush.bf16.msra.mxu0 0
      %482 = vmatpush.bf16.msra.mxu0 0
      %483 = vmatpush.bf16.msra.mxu0 0
      %484 = vmatpush.bf16.msra.mxu0 0
      %485 = vmatpush.bf16.msra.mxu0 0
      %486 = vmatpush.bf16.msra.mxu0 0
      %487 = vmatpush.bf16.msra.mxu0 %v478
      %488 = vmatmul.bf16.gmra.mxu0 %v475
      %v489 = vpop.f32.mrf.mxu0
      %v490 = vadd.f32 %v471, %v489
      %v491 = vpop.f32.mrf.mxu0
      %v492 = vadd.f32 %v473, %v491
      %493 = vdwg.mxu0
      %v494 = vld [vmem:[#allocation3] sm:$0xe]
      %s495 = scalar_lea.vmem %s2, 8
      %v496 = vld [vmem:[%s495] sm:$0xf]
      %v498 = vunpack.c.l.b16 %v494
      %v499 = vpack.c.b16 %v437, %v498
      %v500 = vrot.slane %v499, 1
      %v501 = vrot.slane %v440, 1
      %v502 = vsel %vm346, %v500, %v501
      %v504 = vsel %vm453, %v502, 0
      %v507 = vsel %vm457, %v496, 0
      %509 = vmatpush.bf16.msra.mxu0 0
      %510 = vmatpush.bf16.msra.mxu0 0
      %511 = vmatpush.bf16.msra.mxu0 0
      %512 = vmatpush.bf16.msra.mxu0 0
      %513 = vmatpush.bf16.msra.mxu0 0
      %514 = vmatpush.bf16.msra.mxu0 0
      %515 = vmatpush.bf16.msra.mxu0 0
      %516 = vmatpush.bf16.msra.mxu0 %v507
      %517 = vmatmul.bf16.gmra.mxu0 %v504
      %v518 = vpop.f32.mrf.mxu0
      %v519 = vadd.f32 0.0, %v518
      %v520 = vpop.f32.mrf.mxu0
      %v521 = vadd.f32 0.0, %v520
      %522 = vdwg.mxu0
      %v523 = vadd.f32 %v490, %v519
      %v524 = vadd.f32 %v492, %v521
      %v525 = vperm.slane %v426, 0
      %v526 = vadd.f32 %v523, %v525
      %v527 = vadd.f32 %v524, %v525
      %v528 = vld [vmem:[%s219] sm:$0xf]
      %v529 = vld [vmem:[%s219 + $0x4] sm:$0xf]
      %v530 = vld [vmem:[%s3] sm:$0x3]
      %v531 = vld [vmem:[%s4 + $0x2] sm:$0x1]
      %v532 = vperm.slane %v531, 0
      %v535 = vunpack.c.l.b16 %v528
      %v536 = vunpack.c.l.b16 %v529
      %v537 = vpack.c.b16 %v536, %v535
      %v539 = vsel %vm299, %v537, 0
      %v542 = vsel %vm303, %v530, 0
      %544 = vmatpush.bf16.msra.mxu0 0
      %545 = vmatpush.bf16.msra.mxu0 0
      %546 = vmatpush.bf16.msra.mxu0 0
      %547 = vmatpush.bf16.msra.mxu0 0
      %548 = vmatpush.bf16.msra.mxu0 0
      %549 = vmatpush.bf16.msra.mxu0 0
      %550 = vmatpush.bf16.msra.mxu0 0
      %551 = vmatpush.bf16.msra.mxu0 %v542
      %552 = vmatmul.bf16.gmra.mxu0 %v539
      %v553 = vpop.f32.mrf.mxu0
      %v554 = vadd.f32 %v532, %v553
      %v555 = vpop.f32.mrf.mxu0
      %v556 = vadd.f32 %v532, %v555
      %557 = vdwg.mxu0
      %v558 = vld [vmem:[%s4 + $0x5] sm:$0x1]
      %v559 = vperm.slane %v558, 0
      %v560 = vmul.f32 %v526, %v559
      %v561 = vmul.f32 %v527, %v559
      %v562 = vld [vmem:[%s4 + $0x6] sm:$0x1]
      %v563 = vperm.slane %v562, 0
      %v564 = vadd.f32 %v560, %v563
      %v565 = vadd.f32 %v561, %v563
      %v566 = vadd.f32 %v564, %v554
      %v567 = vadd.f32 %v565, %v556
      %v568 = vmax.f32 %v566, 0.0
      %v569 = vmax.f32 %v567, 0.0
      %570 = vst.msk [vmem:[%s224] sm:$0xff] %vm453, %v568
      %571 = vst.msk [vmem:[%s224 + $0x8] sm:$0xff] %vm453, %v569
      %p572 = scmp.lt.s32.totalorder %s16, 1
      %s573 = scalar_select %p572, %s16, 1
      %s574 = smul.addr %s573, 2
      %s575 = smul.addr %s574, 8
      %s576 = scalar_lea.vmem %s5, %s575
      // Predicated region
      $region41: #{residual_block.5} parent=39 // pred_check
        %p577 = pneg %p144
      $region42: #{residual_block.5} parent=39 // pred_check_branch
        %579 = sbr.rel (%p577) target = $region44
      $region43: #{residual_block.5} parent=39 // pred_region
        _
      $region44: #{residual_block.5} parent=39 // pred_fallthru
        _
    $region40: #{residual_block.5} parent=5 // pred_fallthru
      _
    %p580 = scmp.le.s32.totalorder 2, %s11
    // Predicated region
    $region45: #{residual_block.5} parent=5 // pred_check
      %p581 = pneg %p580
    $region46: #{residual_block.5} parent=5 // pred_check_branch
      %583 = sbr.rel (%p581) target = $region48
    $region47: #{residual_block.5} parent=5 // pred_region
      %s584 = ssub.s32 %s11, 2
      // Predicated region
      $region49: #{residual_block.5} parent=47 // pred_check
        %p585 = pneg %p150
      $region50: #{residual_block.5} parent=47 // pred_check_branch
        %587 = sbr.rel (%p585) target = $region52
      $region51: #{residual_block.5} parent=47 // pred_region
        %p588 = scmp.lt.s32.totalorder %s17, 1
        %s589 = scalar_select %p588, %s17, 1
        %s590 = smul.addr %s589, 2
        %s591 = smul.addr %s590, 8
        %s592 = scalar_lea.vmem %s5, %s591
      $region52: #{residual_block.5} parent=47 // pred_fallthru
        _
    $region48: #{residual_block.5} parent=5 // pred_fallthru
      _
  $region6: #{residual_block.5} parent=0 // loop_footer
    %s15 = sadd.s32 1, %s11
  $region7: #{residual_block.5} parent=0 // loop_footer_branch
    %10 = sbr.rel target = $region3
  $region8: #{residual_block.5} parent=0 // loop_exit
    _

</llo_original>
